<compile_context>
chip_gen: v7x
topology: tpu7x:2x2x1
jax: 0.10.0
libtpu: 0.0.40
codegen_flags: <defaults>
</compile_context>

<pallas_src>
import math
import functools

import jax
import jax.numpy as jnp
from jax.experimental import pallas as pl
from jax.experimental.pallas import tpu as pltpu


# ----------------------------- in-kernel helpers -----------------------------

def _ln(x, gamma, beta, eps=1e-6):
    # UER LayerNorm: gamma * (x - mean) / (std + eps) + beta, torch unbiased std.
    # Exact reciprocal (only an (S, 1) divide); approx error here is amplified by
    # gamma, so it is not worth the EUP slot.
    mean = jnp.mean(x, axis=-1, keepdims=True)
    var = jnp.sum((x - mean) ** 2, axis=-1, keepdims=True) / (x.shape[-1] - 1)
    inv = 1.0 / (jnp.sqrt(var) + eps)
    return gamma * (x - mean) * inv + beta


def _gelu(x):
    # UER gelu: x * 0.5 * (1 + erf(x / sqrt(2)))
    return x * 0.5 * (1.0 + jax.lax.erf(x * jnp.float32(1.0 / math.sqrt(2.0))))


# ------------------------------ transformer layer -----------------------------

def transformer_layer_kernel(hidden_ref,
                             wqkv_ref, bqkv_ref, wo_ref, bo_ref,
                             g1_ref, be1_ref, w1_ref, b1_ref,
                             w2_ref, b2_ref, g2_ref, be2_ref,
                             out_ref, *, heads_num):
    x = hidden_ref[0].astype(jnp.float32)              # (S, H)
    S, H = x.shape
    d = H // heads_num
    cdt = wqkv_ref.dtype                                # MXU operand dtype (bf16)
    x_bf = x.astype(cdt)                                # cast once, reused per head

    # Additive causal mask built in-kernel (matches (1 - tril) * -10000).
    row = jax.lax.broadcasted_iota(jnp.int32, (S, S), 0)
    col = jax.lax.broadcasted_iota(jnp.int32, (S, S), 1)
    mask = jnp.where(col <= row, jnp.float32(0.0), jnp.float32(-10000.0))

    # Contract on the last dim of both operands (A @ B^T without forming B.T).
    contract_last = (((1,), (1,)), ((), ()))

    def head_body(h, acc):
        # Head-major weight layout -> only leading-dim dynamic Ref indexing.
        w_h = wqkv_ref[h]                                # (H, 3d) bf16
        qkv = (jnp.dot(x_bf, w_h, preferred_element_type=jnp.float32)
               + bqkv_ref[h])                            # (S, 3d) f32
        qkv = qkv.astype(cdt)                            # single cast per head
        q_h = qkv[:, 0 * d:1 * d]
        k_h = qkv[:, 1 * d:2 * d]
        v_h = qkv[:, 2 * d:3 * d]

        # 1/sqrt(d) already folded into W_q / b_q host-side.
        scores = jax.lax.dot_general(q_h, k_h,
                                     dimension_numbers=contract_last,
                                     preferred_element_type=jnp.float32)
        scores = scores + mask
        scores = scores - jnp.max(scores, axis=-1, keepdims=True)
        e = jnp.exp(scores)
        p = e * pl.reciprocal(jnp.sum(e, axis=-1, keepdims=True), approx=True)

        ctx_h = jnp.dot(p.astype(cdt), v_h,
                        preferred_element_type=jnp.float32)    # (S, d)
        # Fused output projection: accumulate ctx_h @ W_o[h] directly (no narrow
        # column stores, no ctx scratch).
        return acc + jnp.dot(ctx_h.astype(cdt), wo_ref[h],
                             preferred_element_type=jnp.float32)

    attn = jax.lax.fori_loop(0, heads_num, head_body,
                             jnp.zeros((S, H), jnp.float32)) + bo_ref[...]

    # --- residual + LayerNorm 1 (dropout is a no-op at inference) ---
    inter = _ln(attn + x, g1_ref[...], be1_ref[...])

    # --- positionwise feed-forward (erf-GELU) ---
    ff = _gelu(jnp.dot(inter.astype(cdt), w1_ref[...],
                       preferred_element_type=jnp.float32) + b1_ref[...])
    ffo = (jnp.dot(ff.astype(cdt), w2_ref[...],
                   preferred_element_type=jnp.float32) + b2_ref[...])

    # --- residual + LayerNorm 2 ---
    out = _ln(ffo + inter, g2_ref[...], be2_ref[...])
    out_ref[0] = out.astype(out_ref.dtype)


_PARAM_ORDER = ("wqkv", "bqkv", "wo", "bo", "g1", "be1",
                "w1", "b1", "w2", "b2", "g2", "be2")


def _vmem_limit_bytes(S, H, F, heads_num, param_bytes):
    d = H // heads_num
    act_bytes = 4 * (6 * S * H          # x, attn acc, inter, ffn out, out, temps
                     + 3 * S * S        # scores / exp / probs (one head live)
                     + 2 * S * 3 * d    # per-head qkv (f32 + bf16 copy)
                     + 2 * S * F)       # ffn intermediate (f32 + bf16 copy)
    est = 2 * param_bytes + 2 * act_bytes + (2 << 20)
    # Cap below physical VMEM on every generation (v7x has 64 MiB per TC) and
    # leave headroom for compiler-internal scratch / double-buffered hidden.
    return int(min(48 << 20, max(16 << 20, est)))


@functools.lru_cache(maxsize=None)
def _build_layer_call(B, S, H, F, heads_num, hidden_dtype_name, param_bytes):
    d = H // heads_num
    h3 = 3 * d

    def batch_map(b):
        return (b, 0, 0)

    def const2(b):
        return (0, 0)

    def const3(b):
        return (0, 0, 0)

    param_block_shapes = (
        (heads_num, H, h3),   # wqkv
        (heads_num, 1, h3),   # bqkv
        (heads_num, d, H),    # wo
        (1, H), (1, H), (1, H),    # bo, g1, be1
        (H, F), (1, F),            # w1, b1
        (F, H), (1, H),            # w2, b2
        (1, H), (1, H),            # g2, be2
    )
    in_specs = [pl.BlockSpec((1, S, H), batch_map)]
    for shape in param_block_shapes:
        in_specs.append(pl.BlockSpec(shape, const3 if len(shape) == 3 else const2))

    return pl.pallas_call(
        functools.partial(transformer_layer_kernel, heads_num=heads_num),
        out_shape=jax.ShapeDtypeStruct((B, S, H), jnp.dtype(hidden_dtype_name)),
        grid=(B,),
        in_specs=in_specs,
        out_specs=pl.BlockSpec((1, S, H), batch_map),
        compiler_params=pltpu.CompilerParams(
            dimension_semantics=("parallel",),
            vmem_limit_bytes=_vmem_limit_bytes(S, H, F, heads_num, param_bytes)),
    )


def transformer_layer(hidden, params, heads_num):
    B, S, H = hidden.shape
    if H % heads_num:
        raise ValueError(f"hidden size {H} not divisible by heads_num {heads_num}")
    plist = [params[name] for name in _PARAM_ORDER]
    F = int(params["w1"].shape[1])
    param_bytes = sum(int(p.size) * p.dtype.itemsize for p in plist)
    call = _build_layer_call(int(B), int(S), int(H), F, int(heads_num),
                             hidden.dtype.name, param_bytes)
    return call(hidden, *plist)


# ------------------------- host-side parameter prep ---------------------------

def _prepare_layer_params(p, heads_num, compute_dtype):
    f32 = jnp.float32
    H = p["wq"].shape[0]
    d = H // heads_num
    scale = 1.0 / math.sqrt(d)

    def per_head_cols(w):       # (H, H) -> (heads, H, d)
        return w.reshape(H, heads_num, d).transpose(1, 0, 2)

    def per_head_bias(b):       # (1, H) -> (heads, 1, d)
        return b.reshape(1, heads_num, d).transpose(1, 0, 2)

    # Fold the softmax 1/sqrt(d) scale into W_q and b_q (scores already scaled).
    wq_s = p["wq"] * scale
    bq_s = p["bq"] * scale

    wqkv = jnp.concatenate([per_head_cols(wq_s), per_head_cols(p["wk"]),
                            per_head_cols(p["wv"])], axis=-1)     # (heads, H, 3d)
    bqkv = jnp.concatenate([per_head_bias(bq_s), per_head_bias(p["bk"]),
                            per_head_bias(p["bv"])], axis=-1)     # (heads, 1, 3d)
    wo = p["wo"].reshape(heads_num, d, H)                          # (heads, d, H)

    return {
        "wqkv": wqkv.astype(compute_dtype), "bqkv": bqkv.astype(f32),
        "wo": wo.astype(compute_dtype), "bo": p["bo"].astype(f32),
        "g1": p["g1"].astype(f32), "be1": p["be1"].astype(f32),
        "w1": p["w1"].astype(compute_dtype), "b1": p["b1"].astype(f32),
        "w2": p["w2"].astype(compute_dtype), "b2": p["b2"].astype(f32),
        "g2": p["g2"].astype(f32), "be2": p["be2"].astype(f32),
    }


@functools.partial(jax.jit, static_argnames=("heads_num",))
def _encode(emb, prepared_params, heads_num):
    hidden = emb
    # TODO(synk): fuse layers into a single pallas_call (hidden resident in VMEM,
    # weights streamed via emit_pipeline) to remove the per-layer HBM round trip.
    for p in prepared_params:
        hidden = transformer_layer(hidden, p, heads_num)
    return hidden


def gpt_encoder(emb, seg, layer_params, heads_num, compute_dtype=jnp.bfloat16):
    """emb: [B, S, H], seg: [B, S] (unused, matching the torch module)."""
    del seg
    prepared = tuple(_prepare_layer_params(p, heads_num, compute_dtype)
                     for p in layer_params)
    return _encode(emb, prepared, heads_num)


# ------------------------------- pure-JAX reference ---------------------------

def _ref_layer_norm(x, gamma, beta, eps=1e-6):
    mean = jnp.mean(x, axis=-1, keepdims=True)
    var = jnp.sum((x - mean) ** 2, axis=-1, keepdims=True) / (x.shape[-1] - 1)
    return gamma * (x - mean) / (jnp.sqrt(var) + eps) + beta


def _ref_gelu(x):
    return x * 0.5 * (1.0 + jax.lax.erf(x / math.sqrt(2.0)))


def _ref_layer(x, mask, p, heads_num):
    B, S, H = x.shape
    d = H // heads_num
    q = x @ p["wq"] + p["bq"]
    k = x @ p["wk"] + p["bk"]
    v = x @ p["wv"] + p["bv"]

    def split(t):  # (B,S,H) -> (B,heads,S,d)
        return t.reshape(B, S, heads_num, d).transpose(0, 2, 1, 3)

    qh, kh, vh = split(q), split(k), split(v)
    scores = jnp.einsum("bhqd,bhkd->bhqk", qh, kh) / math.sqrt(d) + mask
    probs = jax.nn.softmax(scores, axis=-1)
    ctx = jnp.einsum("bhqk,bhkd->bhqd", probs, vh)
    ctx = ctx.transpose(0, 2, 1, 3).reshape(B, S, H)
    attn = ctx @ p["wo"] + p["bo"]
    inter = _ref_layer_norm(attn + x, p["g1"], p["be1"])
    ff = _ref_gelu(inter @ p["w1"] + p["b1"]) @ p["w2"] + p["b2"]
    return _ref_layer_norm(ff + inter, p["g2"], p["be2"])


def _ref_encoder(emb, layer_params, heads_num):
    S = emb.shape[1]
    mask = (1.0 - jnp.tril(jnp.ones((S, S), jnp.float32))) * -10000.0
    h = emb
    for p in layer_params:
        h = _ref_layer(h, mask, p, heads_num)
    return h


# ------------------------------------ main ------------------------------------

def _init_layer_params(key, hidden_size, feedforward_size):
    ks = jax.random.split(key, 6)
    scale = 0.02

    def w(k, shape):
        return (scale * jax.random.normal(k, shape)).astype(jnp.float32)

    H, F = hidden_size, feedforward_size
    return {
        "wq": w(ks[0], (H, H)), "bq": jnp.zeros((1, H), jnp.float32),
        "wk": w(ks[1], (H, H)), "bk": jnp.zeros((1, H), jnp.float32),
        "wv": w(ks[2], (H, H)), "bv": jnp.zeros((1, H), jnp.float32),
        "wo": w(ks[3], (H, H)), "bo": jnp.zeros((1, H), jnp.float32),
        "g1": jnp.ones((1, H), jnp.float32), "be1": jnp.zeros((1, H), jnp.float32),
        "w1": w(ks[4], (H, F)), "b1": jnp.zeros((1, F), jnp.float32),
        "w2": w(ks[5], (F, H)), "b2": jnp.zeros((1, H), jnp.float32),
        "g2": jnp.ones((1, H), jnp.float32), "be2": jnp.zeros((1, H), jnp.float32),
    }


if __name__ == "__main__":
    batch_size, seq_length, hidden_size = 2, 8, 32
    heads_num, feedforward_size, layers_num = 4, 64, 2

    root = jax.random.PRNGKey(0)
    k_emb, k_params = jax.random.split(root)
    emb = jax.random.normal(k_emb, (batch_size, seq_length, hidden_size),
                            dtype=jnp.float32)
    seg = jnp.ones((batch_size, seq_length), dtype=jnp.int32)

    layer_keys = jax.random.split(k_params, layers_num)
    layer_params = [_init_layer_params(k, hidden_size, feedforward_size)
                    for k in layer_keys]

    out = gpt_encoder(emb, seg, layer_params, heads_num)   # bf16 MXU operands
    out = jax.block_until_ready(out)

    ref = jax.block_until_ready(_ref_encoder(emb, layer_params, heads_num))
    assert out.shape == (batch_size, seq_length, hidden_size)
    # bf16 MXU operands + approx softmax reciprocal vs pure-f32 reference.
    assert jnp.allclose(out, ref, atol=2e-2, rtol=2e-2), \
        f"max abs err {float(jnp.max(jnp.abs(out - ref)))}"

    print("KERNEL_OK")
</pallas_src>

<mosaic_0001>
module attributes {stable_mosaic.version = 11 : i64} {
  func.func @transformer_layer_kernel(%arg0: i32, %arg1: memref<1x8x32xf32, #tpu.memory_space<vmem>>, %arg2: memref<4x32x24xbf16, #tpu.memory_space<vmem>>, %arg3: memref<4x1x24xf32, #tpu.memory_space<vmem>>, %arg4: memref<4x8x32xbf16, #tpu.memory_space<vmem>>, %arg5: memref<1x32xf32, #tpu.memory_space<vmem>>, %arg6: memref<1x32xf32, #tpu.memory_space<vmem>>, %arg7: memref<1x32xf32, #tpu.memory_space<vmem>>, %arg8: memref<32x64xbf16, #tpu.memory_space<vmem>>, %arg9: memref<1x64xf32, #tpu.memory_space<vmem>>, %arg10: memref<64x32xbf16, #tpu.memory_space<vmem>>, %arg11: memref<1x32xf32, #tpu.memory_space<vmem>>, %arg12: memref<1x32xf32, #tpu.memory_space<vmem>>, %arg13: memref<1x32xf32, #tpu.memory_space<vmem>>, %arg14: memref<1x8x32xf32, #tpu.memory_space<vmem>>) attributes {dimension_semantics = [#tpu.dimension_semantics<parallel>], iteration_bounds = array<i64: 2>, scalar_prefetch = 0 : i64, scratch_operands = 0 : i64, tpu.core_type = #tpu.core_type<tc>, window_params = [{transform_indices = @transform_0, window_bounds = array<i64: 1, 8, 32>}, {pipeline_mode = #tpu.pipeline_mode<synchronous>, transform_indices = @transform_1, window_bounds = array<i64: 4, 32, 24>}, {pipeline_mode = #tpu.pipeline_mode<synchronous>, transform_indices = @transform_2, window_bounds = array<i64: 4, 1, 24>}, {pipeline_mode = #tpu.pipeline_mode<synchronous>, transform_indices = @transform_3, window_bounds = array<i64: 4, 8, 32>}, {pipeline_mode = #tpu.pipeline_mode<synchronous>, transform_indices = @transform_4, window_bounds = array<i64: 1, 32>}, {pipeline_mode = #tpu.pipeline_mode<synchronous>, transform_indices = @transform_5, window_bounds = array<i64: 1, 32>}, {pipeline_mode = #tpu.pipeline_mode<synchronous>, transform_indices = @transform_6, window_bounds = array<i64: 1, 32>}, {pipeline_mode = #tpu.pipeline_mode<synchronous>, transform_indices = @transform_7, window_bounds = array<i64: 32, 64>}, {pipeline_mode = #tpu.pipeline_mode<synchronous>, transform_indices = @transform_8, window_bounds = array<i64: 1, 64>}, {pipeline_mode = #tpu.pipeline_mode<synchronous>, transform_indices = @transform_9, window_bounds = array<i64: 64, 32>}, {pipeline_mode = #tpu.pipeline_mode<synchronous>, transform_indices = @transform_10, window_bounds = array<i64: 1, 32>}, {pipeline_mode = #tpu.pipeline_mode<synchronous>, transform_indices = @transform_11, window_bounds = array<i64: 1, 32>}, {pipeline_mode = #tpu.pipeline_mode<synchronous>, transform_indices = @transform_12, window_bounds = array<i64: 1, 32>}, {transform_indices = @transform_13, window_bounds = array<i64: 1, 8, 32>}]} {
    %c0 = arith.constant 0 : index
    %c0_0 = arith.constant 0 : index
    %c0_1 = arith.constant 0 : index
    %0 = vector.load %arg1[%c0, %c0_0, %c0_1] : memref<1x8x32xf32, #tpu.memory_space<vmem>>, vector<1x8x32xf32>
    %1 = vector.shape_cast %0 : vector<1x8x32xf32> to vector<8x32xf32>
    %2 = arith.truncf %1 : vector<8x32xf32> to vector<8x32xbf16>
    %3 = tpu.iota {dimensions = array<i32: 0>} : vector<8x8xi32>
    %4 = tpu.iota {dimensions = array<i32: 1>} : vector<8x8xi32>
    %5 = arith.cmpi sle, %4, %3 : vector<8x8xi32>
    %cst = arith.constant 0.000000e+00 : f32
    %cst_2 = arith.constant -1.000000e+04 : f32
    %6 = vector.broadcast %cst : f32 to vector<8x8xf32>
    %7 = vector.broadcast %cst_2 : f32 to vector<8x8xf32>
    %8 = arith.select %5, %6, %7 : vector<8x8xi1>, vector<8x8xf32>
    %cst_3 = arith.constant 0.000000e+00 : f32
    %9 = vector.broadcast %cst_3 : f32 to vector<8x32xf32>
    %c0_i32 = arith.constant 0 : i32
    %c4_i32 = arith.constant 4 : i32
    %10 = arith.addi %c0_i32, %c4_i32 : i32
    %c1_i32 = arith.constant 1 : i32
    %11 = scf.for %arg15 = %c0_i32 to %10 step %c1_i32 iter_args(%arg16 = %9) -> (vector<8x32xf32>)  : i32 {
      %92 = arith.index_cast %arg15 : i32 to index
      %c0_43 = arith.constant 0 : index
      %c0_44 = arith.constant 0 : index
      %93 = vector.load %arg2[%92, %c0_43, %c0_44] : memref<4x32x24xbf16, #tpu.memory_space<vmem>>, vector<1x32x24xbf16>
      %94 = vector.shape_cast %93 : vector<1x32x24xbf16> to vector<32x24xbf16>
      %cst_45 = arith.constant dense<0.000000e+00> : vector<8x24xf32>
      %95 = tpu.matmul %2, %94, %cst_45 {dimension_numbers = #tpu.dot_dimension_numbers<[1], [0], [0], [1], [0, 0, 1, 1], [], []>} : vector<8x32xbf16>, vector<32x24xbf16>, vector<8x24xf32> -> vector<8x24xf32>
      %96 = arith.index_cast %arg15 : i32 to index
      %c0_46 = arith.constant 0 : index
      %c0_47 = arith.constant 0 : index
      %97 = vector.load %arg3[%96, %c0_46, %c0_47] : memref<4x1x24xf32, #tpu.memory_space<vmem>>, vector<1x1x24xf32>
      %98 = vector.shape_cast %97 : vector<1x1x24xf32> to vector<1x24xf32>
      %99 = vector.broadcast %98 : vector<1x24xf32> to vector<8x24xf32>
      %100 = arith.addf %95, %99 : vector<8x24xf32>
      %101 = arith.truncf %100 : vector<8x24xf32> to vector<8x24xbf16>
      %102 = vector.extract_strided_slice %101 {offsets = [0, 0], sizes = [8, 8], strides = [1, 1]} : vector<8x24xbf16> to vector<8x8xbf16>
      %103 = vector.extract_strided_slice %101 {offsets = [0, 8], sizes = [8, 8], strides = [1, 1]} : vector<8x24xbf16> to vector<8x8xbf16>
      %104 = vector.extract_strided_slice %101 {offsets = [0, 16], sizes = [8, 8], strides = [1, 1]} : vector<8x24xbf16> to vector<8x8xbf16>
      %cst_48 = arith.constant dense<0.000000e+00> : vector<8x8xf32>
      %105 = tpu.matmul %102, %103, %cst_48 {dimension_numbers = #tpu.dot_dimension_numbers<[1], [1], [0], [0], [0, 0, 1, 0], [], []>} : vector<8x8xbf16>, vector<8x8xbf16>, vector<8x8xf32> -> vector<8x8xf32>
      %106 = arith.addf %105, %8 : vector<8x8xf32>
      %cst_49 = arith.constant dense<0xFF800000> : vector<8xf32>
      %107 = vector.multi_reduction <maximumf>, %106, %cst_49 [1] : vector<8x8xf32> to vector<8xf32>
      %108 = vector.shape_cast %107 : vector<8xf32> to vector<8x1xf32>
      %109 = vector.broadcast %108 : vector<8x1xf32> to vector<8x8xf32>
      %110 = arith.subf %106, %109 : vector<8x8xf32>
      %111 = math.exp %110 : vector<8x8xf32>
      %cst_50 = arith.constant dense<0.000000e+00> : vector<8xf32>
      %112 = vector.multi_reduction <add>, %111, %cst_50 [1] : vector<8x8xf32> to vector<8xf32>
      %113 = vector.shape_cast %112 : vector<8xf32> to vector<8x1xf32>
      %114 = tpu.reciprocal %113 {approx = true} : vector<8x1xf32> -> vector<8x1xf32>
      %115 = vector.broadcast %114 : vector<8x1xf32> to vector<8x8xf32>
      %116 = arith.mulf %111, %115 : vector<8x8xf32>
      %117 = arith.truncf %116 : vector<8x8xf32> to vector<8x8xbf16>
      %cst_51 = arith.constant dense<0.000000e+00> : vector<8x8xf32>
      %118 = tpu.matmul %117, %104, %cst_51 {dimension_numbers = #tpu.dot_dimension_numbers<[1], [0], [0], [1], [0, 0, 1, 1], [], []>} : vector<8x8xbf16>, vector<8x8xbf16>, vector<8x8xf32> -> vector<8x8xf32>
      %119 = arith.truncf %118 : vector<8x8xf32> to vector<8x8xbf16>
      %120 = arith.index_cast %arg15 : i32 to index
      %c0_52 = arith.constant 0 : index
      %c0_53 = arith.constant 0 : index
      %121 = vector.load %arg4[%120, %c0_52, %c0_53] : memref<4x8x32xbf16, #tpu.memory_space<vmem>>, vector<1x8x32xbf16>
      %122 = vector.shape_cast %121 : vector<1x8x32xbf16> to vector<8x32xbf16>
      %cst_54 = arith.constant dense<0.000000e+00> : vector<8x32xf32>
      %123 = tpu.matmul %119, %122, %cst_54 {dimension_numbers = #tpu.dot_dimension_numbers<[1], [0], [0], [1], [0, 0, 1, 1], [], []>} : vector<8x8xbf16>, vector<8x32xbf16>, vector<8x32xf32> -> vector<8x32xf32>
      %124 = arith.addf %arg16, %123 : vector<8x32xf32>
      scf.yield %124 : vector<8x32xf32>
    }
    %c4_i32_4 = arith.constant 4 : i32
    %c0_5 = arith.constant 0 : index
    %c0_6 = arith.constant 0 : index
    %12 = vector.load %arg5[%c0_5, %c0_6] : memref<1x32xf32, #tpu.memory_space<vmem>>, vector<1x32xf32>
    %13 = vector.broadcast %12 : vector<1x32xf32> to vector<8x32xf32>
    %14 = arith.addf %11, %13 : vector<8x32xf32>
    %15 = arith.addf %14, %1 : vector<8x32xf32>
    %c0_7 = arith.constant 0 : index
    %c0_8 = arith.constant 0 : index
    %16 = vector.load %arg6[%c0_7, %c0_8] : memref<1x32xf32, #tpu.memory_space<vmem>>, vector<1x32xf32>
    %c0_9 = arith.constant 0 : index
    %c0_10 = arith.constant 0 : index
    %17 = vector.load %arg7[%c0_9, %c0_10] : memref<1x32xf32, #tpu.memory_space<vmem>>, vector<1x32xf32>
    %cst_11 = arith.constant dense<0.000000e+00> : vector<8xf32>
    %18 = vector.multi_reduction <add>, %15, %cst_11 [1] : vector<8x32xf32> to vector<8xf32>
    %19 = vector.shape_cast %18 : vector<8xf32> to vector<8x1xf32>
    %cst_12 = arith.constant 3.200000e+01 : f32
    %20 = vector.broadcast %cst_12 : f32 to vector<8x1xf32>
    %21 = arith.divf %19, %20 : vector<8x1xf32>
    %22 = vector.broadcast %21 : vector<8x1xf32> to vector<8x32xf32>
    %23 = arith.subf %15, %22 : vector<8x32xf32>
    %24 = arith.mulf %23, %23 : vector<8x32xf32>
    %cst_13 = arith.constant dense<0.000000e+00> : vector<8xf32>
    %25 = vector.multi_reduction <add>, %24, %cst_13 [1] : vector<8x32xf32> to vector<8xf32>
    %26 = vector.shape_cast %25 : vector<8xf32> to vector<8x1xf32>
    %cst_14 = arith.constant 3.100000e+01 : f32
    %27 = vector.broadcast %cst_14 : f32 to vector<8x1xf32>
    %28 = arith.divf %26, %27 : vector<8x1xf32>
    %29 = math.sqrt %28 : vector<8x1xf32>
    %cst_15 = arith.constant 9.99999997E-7 : f32
    %30 = vector.broadcast %cst_15 : f32 to vector<8x1xf32>
    %31 = arith.addf %29, %30 : vector<8x1xf32>
    %cst_16 = arith.constant 1.000000e+00 : f32
    %32 = vector.broadcast %cst_16 : f32 to vector<8x1xf32>
    %33 = arith.divf %32, %31 : vector<8x1xf32>
    %34 = vector.broadcast %21 : vector<8x1xf32> to vector<8x32xf32>
    %35 = arith.subf %15, %34 : vector<8x32xf32>
    %36 = vector.broadcast %16 : vector<1x32xf32> to vector<8x32xf32>
    %37 = arith.mulf %36, %35 : vector<8x32xf32>
    %38 = vector.broadcast %33 : vector<8x1xf32> to vector<8x32xf32>
    %39 = arith.mulf %37, %38 : vector<8x32xf32>
    %40 = vector.broadcast %17 : vector<1x32xf32> to vector<8x32xf32>
    %41 = arith.addf %39, %40 : vector<8x32xf32>
    %42 = arith.truncf %41 : vector<8x32xf32> to vector<8x32xbf16>
    %c0_17 = arith.constant 0 : index
    %c0_18 = arith.constant 0 : index
    %43 = vector.load %arg8[%c0_17, %c0_18] : memref<32x64xbf16, #tpu.memory_space<vmem>>, vector<32x64xbf16>
    %cst_19 = arith.constant dense<0.000000e+00> : vector<8x64xf32>
    %44 = tpu.matmul %42, %43, %cst_19 {dimension_numbers = #tpu.dot_dimension_numbers<[1], [0], [0], [1], [0, 0, 1, 1], [], []>} : vector<8x32xbf16>, vector<32x64xbf16>, vector<8x64xf32> -> vector<8x64xf32>
    %c0_20 = arith.constant 0 : index
    %c0_21 = arith.constant 0 : index
    %45 = vector.load %arg9[%c0_20, %c0_21] : memref<1x64xf32, #tpu.memory_space<vmem>>, vector<1x64xf32>
    %46 = vector.broadcast %45 : vector<1x64xf32> to vector<8x64xf32>
    %47 = arith.addf %44, %46 : vector<8x64xf32>
    %cst_22 = arith.constant 5.000000e-01 : f32
    %48 = vector.broadcast %cst_22 : f32 to vector<8x64xf32>
    %49 = arith.mulf %47, %48 : vector<8x64xf32>
    %cst_23 = arith.constant 0.707106769 : f32
    %50 = vector.broadcast %cst_23 : f32 to vector<8x64xf32>
    %51 = arith.mulf %47, %50 : vector<8x64xf32>
    %52 = math.erf %51 : vector<8x64xf32>
    %cst_24 = arith.constant 1.000000e+00 : f32
    %53 = vector.broadcast %cst_24 : f32 to vector<8x64xf32>
    %54 = arith.addf %53, %52 : vector<8x64xf32>
    %55 = arith.mulf %49, %54 : vector<8x64xf32>
    %56 = arith.truncf %55 : vector<8x64xf32> to vector<8x64xbf16>
    %c0_25 = arith.constant 0 : index
    %c0_26 = arith.constant 0 : index
    %57 = vector.load %arg10[%c0_25, %c0_26] : memref<64x32xbf16, #tpu.memory_space<vmem>>, vector<64x32xbf16>
    %cst_27 = arith.constant dense<0.000000e+00> : vector<8x32xf32>
    %58 = tpu.matmul %56, %57, %cst_27 {dimension_numbers = #tpu.dot_dimension_numbers<[1], [0], [0], [1], [0, 0, 1, 1], [], []>} : vector<8x64xbf16>, vector<64x32xbf16>, vector<8x32xf32> -> vector<8x32xf32>
    %c0_28 = arith.constant 0 : index
    %c0_29 = arith.constant 0 : index
    %59 = vector.load %arg11[%c0_28, %c0_29] : memref<1x32xf32, #tpu.memory_space<vmem>>, vector<1x32xf32>
    %60 = vector.broadcast %59 : vector<1x32xf32> to vector<8x32xf32>
    %61 = arith.addf %58, %60 : vector<8x32xf32>
    %62 = arith.addf %61, %41 : vector<8x32xf32>
    %c0_30 = arith.constant 0 : index
    %c0_31 = arith.constant 0 : index
    %63 = vector.load %arg12[%c0_30, %c0_31] : memref<1x32xf32, #tpu.memory_space<vmem>>, vector<1x32xf32>
    %c0_32 = arith.constant 0 : index
    %c0_33 = arith.constant 0 : index
    %64 = vector.load %arg13[%c0_32, %c0_33] : memref<1x32xf32, #tpu.memory_space<vmem>>, vector<1x32xf32>
    %cst_34 = arith.constant dense<0.000000e+00> : vector<8xf32>
    %65 = vector.multi_reduction <add>, %62, %cst_34 [1] : vector<8x32xf32> to vector<8xf32>
    %66 = vector.shape_cast %65 : vector<8xf32> to vector<8x1xf32>
    %cst_35 = arith.constant 3.200000e+01 : f32
    %67 = vector.broadcast %cst_35 : f32 to vector<8x1xf32>
    %68 = arith.divf %66, %67 : vector<8x1xf32>
    %69 = vector.broadcast %68 : vector<8x1xf32> to vector<8x32xf32>
    %70 = arith.subf %62, %69 : vector<8x32xf32>
    %71 = arith.mulf %70, %70 : vector<8x32xf32>
    %cst_36 = arith.constant dense<0.000000e+00> : vector<8xf32>
    %72 = vector.multi_reduction <add>, %71, %cst_36 [1] : vector<8x32xf32> to vector<8xf32>
    %73 = vector.shape_cast %72 : vector<8xf32> to vector<8x1xf32>
    %cst_37 = arith.constant 3.100000e+01 : f32
    %74 = vector.broadcast %cst_37 : f32 to vector<8x1xf32>
    %75 = arith.divf %73, %74 : vector<8x1xf32>
    %76 = math.sqrt %75 : vector<8x1xf32>
    %cst_38 = arith.constant 9.99999997E-7 : f32
    %77 = vector.broadcast %cst_38 : f32 to vector<8x1xf32>
    %78 = arith.addf %76, %77 : vector<8x1xf32>
    %cst_39 = arith.constant 1.000000e+00 : f32
    %79 = vector.broadcast %cst_39 : f32 to vector<8x1xf32>
    %80 = arith.divf %79, %78 : vector<8x1xf32>
    %81 = vector.broadcast %68 : vector<8x1xf32> to vector<8x32xf32>
    %82 = arith.subf %62, %81 : vector<8x32xf32>
    %83 = vector.broadcast %63 : vector<1x32xf32> to vector<8x32xf32>
    %84 = arith.mulf %83, %82 : vector<8x32xf32>
    %85 = vector.broadcast %80 : vector<8x1xf32> to vector<8x32xf32>
    %86 = arith.mulf %84, %85 : vector<8x32xf32>
    %87 = vector.broadcast %64 : vector<1x32xf32> to vector<8x32xf32>
    %88 = arith.addf %86, %87 : vector<8x32xf32>
    %c0_40 = arith.constant 0 : index
    %c0_41 = arith.constant 0 : index
    %c0_42 = arith.constant 0 : index
    %89 = vector.load %arg14[%c0_40, %c0_41, %c0_42] : memref<1x8x32xf32, #tpu.memory_space<vmem>>, vector<1x8x32xf32>
    %90 = vector.shape_cast %89 : vector<1x8x32xf32> to vector<8x32xf32>
    %91 = vector.shape_cast %88 : vector<8x32xf32> to vector<1x8x32xf32>
    tpu.vector_store %arg14[%c0_40, %c0_41, %c0_42], %91 {strides = array<i32>} : memref<1x8x32xf32, #tpu.memory_space<vmem>>, vector<1x8x32xf32>,
    return
  }
  func.func @transform_0(%arg0: i32) -> (i32, i32, i32) {
    %c0_i32 = arith.constant 0 : i32
    %c0_i32_0 = arith.constant 0 : i32
    %c0_i32_1 = arith.constant 0 : i32
    return %arg0, %c0_i32, %c0_i32_0 : i32, i32, i32
  }
  func.func @transform_1(%arg0: i32) -> (i32, i32, i32) {
    %c0_i32 = arith.constant 0 : i32
    %c0_i32_0 = arith.constant 0 : i32
    %c0_i32_1 = arith.constant 0 : i32
    %c0_i32_2 = arith.constant 0 : i32
    return %c0_i32, %c0_i32_0, %c0_i32_1 : i32, i32, i32
  }
  func.func @transform_2(%arg0: i32) -> (i32, i32, i32) {
    %c0_i32 = arith.constant 0 : i32
    %c0_i32_0 = arith.constant 0 : i32
    %c0_i32_1 = arith.constant 0 : i32
    %c0_i32_2 = arith.constant 0 : i32
    return %c0_i32, %c0_i32_0, %c0_i32_1 : i32, i32, i32
  }
  func.func @transform_3(%arg0: i32) -> (i32, i32, i32) {
    %c0_i32 = arith.constant 0 : i32
    %c0_i32_0 = arith.constant 0 : i32
    %c0_i32_1 = arith.constant 0 : i32
    %c0_i32_2 = arith.constant 0 : i32
    return %c0_i32, %c0_i32_0, %c0_i32_1 : i32, i32, i32
  }
  func.func @transform_4(%arg0: i32) -> (i32, i32) {
    %c0_i32 = arith.constant 0 : i32
    %c0_i32_0 = arith.constant 0 : i32
    %c0_i32_1 = arith.constant 0 : i32
    return %c0_i32, %c0_i32_0 : i32, i32
  }
  func.func @transform_5(%arg0: i32) -> (i32, i32) {
    %c0_i32 = arith.constant 0 : i32
    %c0_i32_0 = arith.constant 0 : i32
    %c0_i32_1 = arith.constant 0 : i32
    return %c0_i32, %c0_i32_0 : i32, i32
  }
  func.func @transform_6(%arg0: i32) -> (i32, i32) {
    %c0_i32 = arith.constant 0 : i32
    %c0_i32_0 = arith.constant 0 : i32
    %c0_i32_1 = arith.constant 0 : i32
    return %c0_i32, %c0_i32_0 : i32, i32
  }
  func.func @transform_7(%arg0: i32) -> (i32, i32) {
    %c0_i32 = arith.constant 0 : i32
    %c0_i32_0 = arith.constant 0 : i32
    %c0_i32_1 = arith.constant 0 : i32
    return %c0_i32, %c0_i32_0 : i32, i32
  }
  func.func @transform_8(%arg0: i32) -> (i32, i32) {
    %c0_i32 = arith.constant 0 : i32
    %c0_i32_0 = arith.constant 0 : i32
    %c0_i32_1 = arith.constant 0 : i32
    return %c0_i32, %c0_i32_0 : i32, i32
  }
  func.func @transform_9(%arg0: i32) -> (i32, i32) {
    %c0_i32 = arith.constant 0 : i32
    %c0_i32_0 = arith.constant 0 : i32
    %c0_i32_1 = arith.constant 0 : i32
    return %c0_i32, %c0_i32_0 : i32, i32
  }
  func.func @transform_10(%arg0: i32) -> (i32, i32) {
    %c0_i32 = arith.constant 0 : i32
    %c0_i32_0 = arith.constant 0 : i32
    %c0_i32_1 = arith.constant 0 : i32
    return %c0_i32, %c0_i32_0 : i32, i32
  }
  func.func @transform_11(%arg0: i32) -> (i32, i32) {
    %c0_i32 = arith.constant 0 : i32
    %c0_i32_0 = arith.constant 0 : i32
    %c0_i32_1 = arith.constant 0 : i32
    return %c0_i32, %c0_i32_0 : i32, i32
  }
  func.func @transform_12(%arg0: i32) -> (i32, i32) {
    %c0_i32 = arith.constant 0 : i32
    %c0_i32_0 = arith.constant 0 : i32
    %c0_i32_1 = arith.constant 0 : i32
    return %c0_i32, %c0_i32_0 : i32, i32
  }
  func.func @transform_13(%arg0: i32) -> (i32, i32, i32) {
    %c0_i32 = arith.constant 0 : i32
    %c0_i32_0 = arith.constant 0 : i32
    %c0_i32_1 = arith.constant 0 : i32
    return %arg0, %c0_i32, %c0_i32_0 : i32, i32, i32
  }
}

module attributes {stable_mosaic.version = 11 : i64} {
  func.func @transformer_layer_kernel(%arg0: i32, %arg1: memref<1x8x32xf32, #tpu.memory_space<vmem>>, %arg2: memref<4x32x24xbf16, #tpu.memory_space<vmem>>, %arg3: memref<4x1x24xf32, #tpu.memory_space<vmem>>, %arg4: memref<4x8x32xbf16, #tpu.memory_space<vmem>>, %arg5: memref<1x32xf32, #tpu.memory_space<vmem>>, %arg6: memref<1x32xf32, #tpu.memory_space<vmem>>, %arg7: memref<1x32xf32, #tpu.memory_space<vmem>>, %arg8: memref<32x64xbf16, #tpu.memory_space<vmem>>, %arg9: memref<1x64xf32, #tpu.memory_space<vmem>>, %arg10: memref<64x32xbf16, #tpu.memory_space<vmem>>, %arg11: memref<1x32xf32, #tpu.memory_space<vmem>>, %arg12: memref<1x32xf32, #tpu.memory_space<vmem>>, %arg13: memref<1x32xf32, #tpu.memory_space<vmem>>, %arg14: memref<1x8x32xf32, #tpu.memory_space<vmem>>) attributes {dimension_semantics = [#tpu.dimension_semantics<parallel>], iteration_bounds = array<i64: 2>, scalar_prefetch = 0 : i64, scratch_operands = 0 : i64, tpu.core_type = #tpu.core_type<tc>, window_params = [{transform_indices = @transform_0, window_bounds = array<i64: 1, 8, 32>}, {pipeline_mode = #tpu.pipeline_mode<synchronous>, transform_indices = @transform_1, window_bounds = array<i64: 4, 32, 24>}, {pipeline_mode = #tpu.pipeline_mode<synchronous>, transform_indices = @transform_2, window_bounds = array<i64: 4, 1, 24>}, {pipeline_mode = #tpu.pipeline_mode<synchronous>, transform_indices = @transform_3, window_bounds = array<i64: 4, 8, 32>}, {pipeline_mode = #tpu.pipeline_mode<synchronous>, transform_indices = @transform_4, window_bounds = array<i64: 1, 32>}, {pipeline_mode = #tpu.pipeline_mode<synchronous>, transform_indices = @transform_5, window_bounds = array<i64: 1, 32>}, {pipeline_mode = #tpu.pipeline_mode<synchronous>, transform_indices = @transform_6, window_bounds = array<i64: 1, 32>}, {pipeline_mode = #tpu.pipeline_mode<synchronous>, transform_indices = @transform_7, window_bounds = array<i64: 32, 64>}, {pipeline_mode = #tpu.pipeline_mode<synchronous>, transform_indices = @transform_8, window_bounds = array<i64: 1, 64>}, {pipeline_mode = #tpu.pipeline_mode<synchronous>, transform_indices = @transform_9, window_bounds = array<i64: 64, 32>}, {pipeline_mode = #tpu.pipeline_mode<synchronous>, transform_indices = @transform_10, window_bounds = array<i64: 1, 32>}, {pipeline_mode = #tpu.pipeline_mode<synchronous>, transform_indices = @transform_11, window_bounds = array<i64: 1, 32>}, {pipeline_mode = #tpu.pipeline_mode<synchronous>, transform_indices = @transform_12, window_bounds = array<i64: 1, 32>}, {transform_indices = @transform_13, window_bounds = array<i64: 1, 8, 32>}]} {
    %c0 = arith.constant 0 : index
    %c0_0 = arith.constant 0 : index
    %c0_1 = arith.constant 0 : index
    %0 = vector.load %arg1[%c0, %c0_0, %c0_1] : memref<1x8x32xf32, #tpu.memory_space<vmem>>, vector<1x8x32xf32>
    %1 = vector.shape_cast %0 : vector<1x8x32xf32> to vector<8x32xf32>
    %2 = arith.truncf %1 : vector<8x32xf32> to vector<8x32xbf16>
    %3 = tpu.iota {dimensions = array<i32: 0>} : vector<8x8xi32>
    %4 = tpu.iota {dimensions = array<i32: 1>} : vector<8x8xi32>
    %5 = arith.cmpi sle, %4, %3 : vector<8x8xi32>
    %cst = arith.constant 0.000000e+00 : f32
    %cst_2 = arith.constant -1.000000e+04 : f32
    %6 = vector.broadcast %cst : f32 to vector<8x8xf32>
    %7 = vector.broadcast %cst_2 : f32 to vector<8x8xf32>
    %8 = arith.select %5, %6, %7 : vector<8x8xi1>, vector<8x8xf32>
    %cst_3 = arith.constant 0.000000e+00 : f32
    %9 = vector.broadcast %cst_3 : f32 to vector<8x32xf32>
    %c0_i32 = arith.constant 0 : i32
    %c4_i32 = arith.constant 4 : i32
    %10 = arith.addi %c0_i32, %c4_i32 : i32
    %c1_i32 = arith.constant 1 : i32
    %11 = scf.for %arg15 = %c0_i32 to %10 step %c1_i32 iter_args(%arg16 = %9) -> (vector<8x32xf32>)  : i32 {
      %92 = arith.index_cast %arg15 : i32 to index
      %c0_43 = arith.constant 0 : index
      %c0_44 = arith.constant 0 : index
      %93 = vector.load %arg2[%92, %c0_43, %c0_44] : memref<4x32x24xbf16, #tpu.memory_space<vmem>>, vector<1x32x24xbf16>
      %94 = vector.shape_cast %93 : vector<1x32x24xbf16> to vector<32x24xbf16>
      %cst_45 = arith.constant dense<0.000000e+00> : vector<8x24xf32>
      %95 = tpu.matmul %2, %94, %cst_45 {dimension_numbers = #tpu.dot_dimension_numbers<[1], [0], [0], [1], [0, 0, 1, 1], [], []>} : vector<8x32xbf16>, vector<32x24xbf16>, vector<8x24xf32> -> vector<8x24xf32>
      %96 = arith.index_cast %arg15 : i32 to index
      %c0_46 = arith.constant 0 : index
      %c0_47 = arith.constant 0 : index
      %97 = vector.load %arg3[%96, %c0_46, %c0_47] : memref<4x1x24xf32, #tpu.memory_space<vmem>>, vector<1x1x24xf32>
      %98 = vector.shape_cast %97 : vector<1x1x24xf32> to vector<1x24xf32>
      %99 = vector.broadcast %98 : vector<1x24xf32> to vector<8x24xf32>
      %100 = arith.addf %95, %99 : vector<8x24xf32>
      %101 = arith.truncf %100 : vector<8x24xf32> to vector<8x24xbf16>
      %102 = vector.extract_strided_slice %101 {offsets = [0, 0], sizes = [8, 8], strides = [1, 1]} : vector<8x24xbf16> to vector<8x8xbf16>
      %103 = vector.extract_strided_slice %101 {offsets = [0, 8], sizes = [8, 8], strides = [1, 1]} : vector<8x24xbf16> to vector<8x8xbf16>
      %104 = vector.extract_strided_slice %101 {offsets = [0, 16], sizes = [8, 8], strides = [1, 1]} : vector<8x24xbf16> to vector<8x8xbf16>
      %cst_48 = arith.constant dense<0.000000e+00> : vector<8x8xf32>
      %105 = tpu.matmul %102, %103, %cst_48 {dimension_numbers = #tpu.dot_dimension_numbers<[1], [1], [0], [0], [0, 0, 1, 0], [], []>} : vector<8x8xbf16>, vector<8x8xbf16>, vector<8x8xf32> -> vector<8x8xf32>
      %106 = arith.addf %105, %8 : vector<8x8xf32>
      %cst_49 = arith.constant dense<0xFF800000> : vector<8xf32>
      %107 = vector.multi_reduction <maximumf>, %106, %cst_49 [1] : vector<8x8xf32> to vector<8xf32>
      %108 = vector.shape_cast %107 : vector<8xf32> to vector<8x1xf32>
      %109 = vector.broadcast %108 : vector<8x1xf32> to vector<8x8xf32>
      %110 = arith.subf %106, %109 : vector<8x8xf32>
      %111 = math.exp %110 : vector<8x8xf32>
      %cst_50 = arith.constant dense<0.000000e+00> : vector<8xf32>
      %112 = vector.multi_reduction <add>, %111, %cst_50 [1] : vector<8x8xf32> to vector<8xf32>
      %113 = vector.shape_cast %112 : vector<8xf32> to vector<8x1xf32>
      %114 = tpu.reciprocal %113 {approx = true} : vector<8x1xf32> -> vector<8x1xf32>
      %115 = vector.broadcast %114 : vector<8x1xf32> to vector<8x8xf32>
      %116 = arith.mulf %111, %115 : vector<8x8xf32>
      %117 = arith.truncf %116 : vector<8x8xf32> to vector<8x8xbf16>
      %cst_51 = arith.constant dense<0.000000e+00> : vector<8x8xf32>
      %118 = tpu.matmul %117, %104, %cst_51 {dimension_numbers = #tpu.dot_dimension_numbers<[1], [0], [0], [1], [0, 0, 1, 1], [], []>} : vector<8x8xbf16>, vector<8x8xbf16>, vector<8x8xf32> -> vector<8x8xf32>
      %119 = arith.truncf %118 : vector<8x8xf32> to vector<8x8xbf16>
      %120 = arith.index_cast %arg15 : i32 to index
      %c0_52 = arith.constant 0 : index
      %c0_53 = arith.constant 0 : index
      %121 = vector.load %arg4[%120, %c0_52, %c0_53] : memref<4x8x32xbf16, #tpu.memory_space<vmem>>, vector<1x8x32xbf16>
      %122 = vector.shape_cast %121 : vector<1x8x32xbf16> to vector<8x32xbf16>
      %cst_54 = arith.constant dense<0.000000e+00> : vector<8x32xf32>
      %123 = tpu.matmul %119, %122, %cst_54 {dimension_numbers = #tpu.dot_dimension_numbers<[1], [0], [0], [1], [0, 0, 1, 1], [], []>} : vector<8x8xbf16>, vector<8x32xbf16>, vector<8x32xf32> -> vector<8x32xf32>
      %124 = arith.addf %arg16, %123 : vector<8x32xf32>
      scf.yield %124 : vector<8x32xf32>
    }
    %c4_i32_4 = arith.constant 4 : i32
    %c0_5 = arith.constant 0 : index
    %c0_6 = arith.constant 0 : index
    %12 = vector.load %arg5[%c0_5, %c0_6] : memref<1x32xf32, #tpu.memory_space<vmem>>, vector<1x32xf32>
    %13 = vector.broadcast %12 : vector<1x32xf32> to vector<8x32xf32>
    %14 = arith.addf %11, %13 : vector<8x32xf32>
    %15 = arith.addf %14, %1 : vector<8x32xf32>
    %c0_7 = arith.constant 0 : index
    %c0_8 = arith.constant 0 : index
    %16 = vector.load %arg6[%c0_7, %c0_8] : memref<1x32xf32, #tpu.memory_space<vmem>>, vector<1x32xf32>
    %c0_9 = arith.constant 0 : index
    %c0_10 = arith.constant 0 : index
    %17 = vector.load %arg7[%c0_9, %c0_10] : memref<1x32xf32, #tpu.memory_space<vmem>>, vector<1x32xf32>
    %cst_11 = arith.constant dense<0.000000e+00> : vector<8xf32>
    %18 = vector.multi_reduction <add>, %15, %cst_11 [1] : vector<8x32xf32> to vector<8xf32>
    %19 = vector.shape_cast %18 : vector<8xf32> to vector<8x1xf32>
    %cst_12 = arith.constant 3.200000e+01 : f32
    %20 = vector.broadcast %cst_12 : f32 to vector<8x1xf32>
    %21 = arith.divf %19, %20 : vector<8x1xf32>
    %22 = vector.broadcast %21 : vector<8x1xf32> to vector<8x32xf32>
    %23 = arith.subf %15, %22 : vector<8x32xf32>
    %24 = arith.mulf %23, %23 : vector<8x32xf32>
    %cst_13 = arith.constant dense<0.000000e+00> : vector<8xf32>
    %25 = vector.multi_reduction <add>, %24, %cst_13 [1] : vector<8x32xf32> to vector<8xf32>
    %26 = vector.shape_cast %25 : vector<8xf32> to vector<8x1xf32>
    %cst_14 = arith.constant 3.100000e+01 : f32
    %27 = vector.broadcast %cst_14 : f32 to vector<8x1xf32>
    %28 = arith.divf %26, %27 : vector<8x1xf32>
    %29 = math.sqrt %28 : vector<8x1xf32>
    %cst_15 = arith.constant 9.99999997E-7 : f32
    %30 = vector.broadcast %cst_15 : f32 to vector<8x1xf32>
    %31 = arith.addf %29, %30 : vector<8x1xf32>
    %cst_16 = arith.constant 1.000000e+00 : f32
    %32 = vector.broadcast %cst_16 : f32 to vector<8x1xf32>
    %33 = arith.divf %32, %31 : vector<8x1xf32>
    %34 = vector.broadcast %21 : vector<8x1xf32> to vector<8x32xf32>
    %35 = arith.subf %15, %34 : vector<8x32xf32>
    %36 = vector.broadcast %16 : vector<1x32xf32> to vector<8x32xf32>
    %37 = arith.mulf %36, %35 : vector<8x32xf32>
    %38 = vector.broadcast %33 : vector<8x1xf32> to vector<8x32xf32>
    %39 = arith.mulf %37, %38 : vector<8x32xf32>
    %40 = vector.broadcast %17 : vector<1x32xf32> to vector<8x32xf32>
    %41 = arith.addf %39, %40 : vector<8x32xf32>
    %42 = arith.truncf %41 : vector<8x32xf32> to vector<8x32xbf16>
    %c0_17 = arith.constant 0 : index
    %c0_18 = arith.constant 0 : index
    %43 = vector.load %arg8[%c0_17, %c0_18] : memref<32x64xbf16, #tpu.memory_space<vmem>>, vector<32x64xbf16>
    %cst_19 = arith.constant dense<0.000000e+00> : vector<8x64xf32>
    %44 = tpu.matmul %42, %43, %cst_19 {dimension_numbers = #tpu.dot_dimension_numbers<[1], [0], [0], [1], [0, 0, 1, 1], [], []>} : vector<8x32xbf16>, vector<32x64xbf16>, vector<8x64xf32> -> vector<8x64xf32>
    %c0_20 = arith.constant 0 : index
    %c0_21 = arith.constant 0 : index
    %45 = vector.load %arg9[%c0_20, %c0_21] : memref<1x64xf32, #tpu.memory_space<vmem>>, vector<1x64xf32>
    %46 = vector.broadcast %45 : vector<1x64xf32> to vector<8x64xf32>
    %47 = arith.addf %44, %46 : vector<8x64xf32>
    %cst_22 = arith.constant 5.000000e-01 : f32
    %48 = vector.broadcast %cst_22 : f32 to vector<8x64xf32>
    %49 = arith.mulf %47, %48 : vector<8x64xf32>
    %cst_23 = arith.constant 0.707106769 : f32
    %50 = vector.broadcast %cst_23 : f32 to vector<8x64xf32>
    %51 = arith.mulf %47, %50 : vector<8x64xf32>
    %52 = math.erf %51 : vector<8x64xf32>
    %cst_24 = arith.constant 1.000000e+00 : f32
    %53 = vector.broadcast %cst_24 : f32 to vector<8x64xf32>
    %54 = arith.addf %53, %52 : vector<8x64xf32>
    %55 = arith.mulf %49, %54 : vector<8x64xf32>
    %56 = arith.truncf %55 : vector<8x64xf32> to vector<8x64xbf16>
    %c0_25 = arith.constant 0 : index
    %c0_26 = arith.constant 0 : index
    %57 = vector.load %arg10[%c0_25, %c0_26] : memref<64x32xbf16, #tpu.memory_space<vmem>>, vector<64x32xbf16>
    %cst_27 = arith.constant dense<0.000000e+00> : vector<8x32xf32>
    %58 = tpu.matmul %56, %57, %cst_27 {dimension_numbers = #tpu.dot_dimension_numbers<[1], [0], [0], [1], [0, 0, 1, 1], [], []>} : vector<8x64xbf16>, vector<64x32xbf16>, vector<8x32xf32> -> vector<8x32xf32>
    %c0_28 = arith.constant 0 : index
    %c0_29 = arith.constant 0 : index
    %59 = vector.load %arg11[%c0_28, %c0_29] : memref<1x32xf32, #tpu.memory_space<vmem>>, vector<1x32xf32>
    %60 = vector.broadcast %59 : vector<1x32xf32> to vector<8x32xf32>
    %61 = arith.addf %58, %60 : vector<8x32xf32>
    %62 = arith.addf %61, %41 : vector<8x32xf32>
    %c0_30 = arith.constant 0 : index
    %c0_31 = arith.constant 0 : index
    %63 = vector.load %arg12[%c0_30, %c0_31] : memref<1x32xf32, #tpu.memory_space<vmem>>, vector<1x32xf32>
    %c0_32 = arith.constant 0 : index
    %c0_33 = arith.constant 0 : index
    %64 = vector.load %arg13[%c0_32, %c0_33] : memref<1x32xf32, #tpu.memory_space<vmem>>, vector<1x32xf32>
    %cst_34 = arith.constant dense<0.000000e+00> : vector<8xf32>
    %65 = vector.multi_reduction <add>, %62, %cst_34 [1] : vector<8x32xf32> to vector<8xf32>
    %66 = vector.shape_cast %65 : vector<8xf32> to vector<8x1xf32>
    %cst_35 = arith.constant 3.200000e+01 : f32
    %67 = vector.broadcast %cst_35 : f32 to vector<8x1xf32>
    %68 = arith.divf %66, %67 : vector<8x1xf32>
    %69 = vector.broadcast %68 : vector<8x1xf32> to vector<8x32xf32>
    %70 = arith.subf %62, %69 : vector<8x32xf32>
    %71 = arith.mulf %70, %70 : vector<8x32xf32>
    %cst_36 = arith.constant dense<0.000000e+00> : vector<8xf32>
    %72 = vector.multi_reduction <add>, %71, %cst_36 [1] : vector<8x32xf32> to vector<8xf32>
    %73 = vector.shape_cast %72 : vector<8xf32> to vector<8x1xf32>
    %cst_37 = arith.constant 3.100000e+01 : f32
    %74 = vector.broadcast %cst_37 : f32 to vector<8x1xf32>
    %75 = arith.divf %73, %74 : vector<8x1xf32>
    %76 = math.sqrt %75 : vector<8x1xf32>
    %cst_38 = arith.constant 9.99999997E-7 : f32
    %77 = vector.broadcast %cst_38 : f32 to vector<8x1xf32>
    %78 = arith.addf %76, %77 : vector<8x1xf32>
    %cst_39 = arith.constant 1.000000e+00 : f32
    %79 = vector.broadcast %cst_39 : f32 to vector<8x1xf32>
    %80 = arith.divf %79, %78 : vector<8x1xf32>
    %81 = vector.broadcast %68 : vector<8x1xf32> to vector<8x32xf32>
    %82 = arith.subf %62, %81 : vector<8x32xf32>
    %83 = vector.broadcast %63 : vector<1x32xf32> to vector<8x32xf32>
    %84 = arith.mulf %83, %82 : vector<8x32xf32>
    %85 = vector.broadcast %80 : vector<8x1xf32> to vector<8x32xf32>
    %86 = arith.mulf %84, %85 : vector<8x32xf32>
    %87 = vector.broadcast %64 : vector<1x32xf32> to vector<8x32xf32>
    %88 = arith.addf %86, %87 : vector<8x32xf32>
    %c0_40 = arith.constant 0 : index
    %c0_41 = arith.constant 0 : index
    %c0_42 = arith.constant 0 : index
    %89 = vector.load %arg14[%c0_40, %c0_41, %c0_42] : memref<1x8x32xf32, #tpu.memory_space<vmem>>, vector<1x8x32xf32>
    %90 = vector.shape_cast %89 : vector<1x8x32xf32> to vector<8x32xf32>
    %91 = vector.shape_cast %88 : vector<8x32xf32> to vector<1x8x32xf32>
    tpu.vector_store %arg14[%c0_40, %c0_41, %c0_42], %91 {strides = array<i32>} : memref<1x8x32xf32, #tpu.memory_space<vmem>>, vector<1x8x32xf32>,
    return
  }
  func.func @transform_0(%arg0: i32) -> (i32, i32, i32) {
    %c0_i32 = arith.constant 0 : i32
    %c0_i32_0 = arith.constant 0 : i32
    %c0_i32_1 = arith.constant 0 : i32
    return %arg0, %c0_i32, %c0_i32_0 : i32, i32, i32
  }
  func.func @transform_1(%arg0: i32) -> (i32, i32, i32) {
    %c0_i32 = arith.constant 0 : i32
    %c0_i32_0 = arith.constant 0 : i32
    %c0_i32_1 = arith.constant 0 : i32
    %c0_i32_2 = arith.constant 0 : i32
    return %c0_i32, %c0_i32_0, %c0_i32_1 : i32, i32, i32
  }
  func.func @transform_2(%arg0: i32) -> (i32, i32, i32) {
    %c0_i32 = arith.constant 0 : i32
    %c0_i32_0 = arith.constant 0 : i32
    %c0_i32_1 = arith.constant 0 : i32
    %c0_i32_2 = arith.constant 0 : i32
    return %c0_i32, %c0_i32_0, %c0_i32_1 : i32, i32, i32
  }
  func.func @transform_3(%arg0: i32) -> (i32, i32, i32) {
    %c0_i32 = arith.constant 0 : i32
    %c0_i32_0 = arith.constant 0 : i32
    %c0_i32_1 = arith.constant 0 : i32
    %c0_i32_2 = arith.constant 0 : i32
    return %c0_i32, %c0_i32_0, %c0_i32_1 : i32, i32, i32
  }
  func.func @transform_4(%arg0: i32) -> (i32, i32) {
    %c0_i32 = arith.constant 0 : i32
    %c0_i32_0 = arith.constant 0 : i32
    %c0_i32_1 = arith.constant 0 : i32
    return %c0_i32, %c0_i32_0 : i32, i32
  }
  func.func @transform_5(%arg0: i32) -> (i32, i32) {
    %c0_i32 = arith.constant 0 : i32
    %c0_i32_0 = arith.constant 0 : i32
    %c0_i32_1 = arith.constant 0 : i32
    return %c0_i32, %c0_i32_0 : i32, i32
  }
  func.func @transform_6(%arg0: i32) -> (i32, i32) {
    %c0_i32 = arith.constant 0 : i32
    %c0_i32_0 = arith.constant 0 : i32
    %c0_i32_1 = arith.constant 0 : i32
    return %c0_i32, %c0_i32_0 : i32, i32
  }
  func.func @transform_7(%arg0: i32) -> (i32, i32) {
    %c0_i32 = arith.constant 0 : i32
    %c0_i32_0 = arith.constant 0 : i32
    %c0_i32_1 = arith.constant 0 : i32
    return %c0_i32, %c0_i32_0 : i32, i32
  }
  func.func @transform_8(%arg0: i32) -> (i32, i32) {
    %c0_i32 = arith.constant 0 : i32
    %c0_i32_0 = arith.constant 0 : i32
    %c0_i32_1 = arith.constant 0 : i32
    return %c0_i32, %c0_i32_0 : i32, i32
  }
  func.func @transform_9(%arg0: i32) -> (i32, i32) {
    %c0_i32 = arith.constant 0 : i32
    %c0_i32_0 = arith.constant 0 : i32
    %c0_i32_1 = arith.constant 0 : i32
    return %c0_i32, %c0_i32_0 : i32, i32
  }
  func.func @transform_10(%arg0: i32) -> (i32, i32) {
    %c0_i32 = arith.constant 0 : i32
    %c0_i32_0 = arith.constant 0 : i32
    %c0_i32_1 = arith.constant 0 : i32
    return %c0_i32, %c0_i32_0 : i32, i32
  }
  func.func @transform_11(%arg0: i32) -> (i32, i32) {
    %c0_i32 = arith.constant 0 : i32
    %c0_i32_0 = arith.constant 0 : i32
    %c0_i32_1 = arith.constant 0 : i32
    return %c0_i32, %c0_i32_0 : i32, i32
  }
  func.func @transform_12(%arg0: i32) -> (i32, i32) {
    %c0_i32 = arith.constant 0 : i32
    %c0_i32_0 = arith.constant 0 : i32
    %c0_i32_1 = arith.constant 0 : i32
    return %c0_i32, %c0_i32_0 : i32, i32
  }
  func.func @transform_13(%arg0: i32) -> (i32, i32, i32) {
    %c0_i32 = arith.constant 0 : i32
    %c0_i32_0 = arith.constant 0 : i32
    %c0_i32_1 = arith.constant 0 : i32
    return %arg0, %c0_i32, %c0_i32_0 : i32, i32, i32
  }
}

</mosaic_0001>

<llo_original>
// kernel: _encode.3
$region0: #{_encode.3}
  #allocation0 [shape = 'u32[]', space=smem, size = 0x4, offset = 0x4, fixed_abs, tag = 'smem constant byte address 0x4 - core index']
  #allocation1 [shape = 'u32[144,128]{1,0:T(1,128)}', space=vmem, size = 0x12000, scoped, tag = 'internal scratch']
  %s0 = inlined_call_operand.vmem [shape: f32[2,8,32], index: 0, kind: input, shape index: {}]
  %s1 = inlined_call_operand.vmem [shape: bf16[4,32,24], index: 1, kind: input, shape index: {}]
  %s2 = inlined_call_operand.vmem [shape: f32[4,1,24], index: 2, kind: input, shape index: {}]
  %s3 = inlined_call_operand.vmem [shape: bf16[4,8,32], index: 3, kind: input, shape index: {}]
  %s4 = inlined_call_operand.vmem [shape: f32[1,32], index: 4, kind: input, shape index: {}]
  %s5 = inlined_call_operand.vmem [shape: f32[1,32], index: 5, kind: input, shape index: {}]
  %s6 = inlined_call_operand.vmem [shape: f32[1,32], index: 6, kind: input, shape index: {}]
  %s7 = inlined_call_operand.vmem [shape: bf16[32,64], index: 7, kind: input, shape index: {}]
  %s8 = inlined_call_operand.vmem [shape: f32[1,64], index: 8, kind: input, shape index: {}]
  %s9 = inlined_call_operand.vmem [shape: bf16[64,32], index: 9, kind: input, shape index: {}]
  %s10 = inlined_call_operand.vmem [shape: f32[1,32], index: 10, kind: input, shape index: {}]
  %s11 = inlined_call_operand.vmem [shape: f32[1,32], index: 11, kind: input, shape index: {}]
  %s12 = inlined_call_operand.vmem [shape: f32[1,32], index: 12, kind: input, shape index: {}]
  %s13 = inlined_call_operand.hbm [shape: f32[2,8,32], index: 13, kind: output, shape index: {}]
  %s14 = sld [smem:[#allocation0]]
  $region92: #{_encode.3} parent=0
    _
  %s16 = ssub.s32 1, %s14
  %s17 = scalar_select 0, %s16, %s14
  $region1: #{_encode.3} parent=0
    #allocation2 [shape = 'u8[8192]{0}', space=vmem, size = 0x2000, scoped, tag = 'output window, operand 0']
    #allocation3 [shape = 's32[2]{0}', space=sflag, size = 0x8, scoped, tag = 'scoped memory for _encode.3']
    %18 = vsyncpa [#allocation3], 0
    %s19 = scalar_lea.sflag [#allocation3], 1
    %20 = vsyncpa %s19, 0
    loop: start=0, step=1, limit=4
    $region2: #{_encode.3} parent=1 // loop_pre_header
      _
    $region3: #{_encode.3} parent=1 // loop_header
      %s22 = sphi 0, %s26
      %p23 = scmp.ge.s32.totalorder %s22, 4
      %s32 = sphi 0, %s34
      %s35 = sphi 0, %s32
      %s36 = sphi 0, %s35
      %s52 = sphi 0, %s36
      %s56 = sphi 0, %s56
      %s58 = sphi 0, %s56
      %s59 = sphi 0, %s58
      %s73 = sphi 0, %s59
      %s77 = sphi 0, %s77
      %s79 = sphi 0, %s77
      %s80 = sphi 0, %s79
      %s94 = sphi 0, %s80
      %s98 = sphi 0, %s98
      %s100 = sphi 0, %s98
      %s101 = sphi 0, %s100
      %s115 = sphi 0, %s101
      %s119 = sphi 0, %s119
      %s121 = sphi 0, %s119
      %s122 = sphi 0, %s121
      %s136 = sphi 0, %s122
      %s140 = sphi 0, %s140
      %s142 = sphi 0, %s140
      %s143 = sphi 0, %s142
      %s157 = sphi 0, %s143
      %s161 = sphi 0, %s161
      %s163 = sphi 0, %s161
      %s164 = sphi 0, %s163
      %s178 = sphi 0, %s164
      %s182 = sphi 0, %s182
      %s184 = sphi 0, %s182
      %s185 = sphi 0, %s184
      %s199 = sphi 0, %s185
      %s203 = sphi 0, %s203
      %s205 = sphi 0, %s203
      %s206 = sphi 0, %s205
      %s220 = sphi 0, %s206
      %s224 = sphi 0, %s224
      %s226 = sphi 0, %s224
      %s227 = sphi 0, %s226
      %s241 = sphi 0, %s227
      %s245 = sphi 0, %s245
      %s247 = sphi 0, %s245
      %s248 = sphi 0, %s247
      %s262 = sphi 0, %s248
      %s266 = sphi 0, %s266
      %s268 = sphi 0, %s266
      %s269 = sphi 0, %s268
      %s283 = sphi 0, %s269
      %s287 = sphi 0, %s287
      %s289 = sphi 0, %s287
      %s290 = sphi 0, %s289
      %s304 = sphi 0, %s290
      %s310 = sphi 0, %s312
      %s313 = sphi 0, %s310
      %s314 = sphi 0, %s313
      %s330 = sphi 0, %s314
    $region4: #{_encode.3} parent=1 // loop_header_branch
      %25 = sbr.rel (%p23) target = $region8
    $region5: #{_encode.3} parent=1 // loop_body
      %s27 = ssub.s32 %s22, 1
      %s28 = ssub.s32 %s22, 2
      %s29 = sadd.s32 %s22, 1
      %s30 = ssub.s32 %s22, %s29
      %p31 = scmp.eq.s32.totalorder %s30, 0
      %s33 = sadd.s32 %s32, 1
      %s34 = scalar_select %p31, %s32, %s33
      %p37 = pneg %p31
      %p38 = scmp.eq.s32.totalorder %s22, 1
      %p39 = por %p37, %p38
      %p40 = scmp.ne.s32.totalorder %s32, %s35
      %p41 = scmp.eq.s32.totalorder %s22, 0
      %p42 = por %p40, %p41
      %p43 = scmp.ne.s32.totalorder %s32, %s35
      %p44 = scmp.eq.s32.totalorder %s27, 1
      %p45 = por %p43, %p44
      %p46 = scmp.ne.s32.totalorder %s35, %s36
      %p47 = scmp.eq.s32.totalorder %s27, 0
      %p48 = por %p46, %p47
      %p49 = scmp.ne.s32.totalorder %s35, %s36
      %p50 = scmp.eq.s32.totalorder %s28, 1
      %p51 = por %p49, %p50
      %p53 = scmp.ne.s32.totalorder %s36, %s52
      %p54 = scmp.eq.s32.totalorder %s28, 0
      %p55 = por %p53, %p54
      %s57 = sadd.s32 %s56, 1
      %p60 = scmp.eq.s32.totalorder %s22, 1
      %p61 = scmp.ne.s32.totalorder %s56, %s58
      %p62 = scmp.eq.s32.totalorder %s22, 0
      %p63 = por %p61, %p62
      %p64 = scmp.ne.s32.totalorder %s56, %s58
      %p65 = scmp.eq.s32.totalorder %s27, 1
      %p66 = por %p64, %p65
      %p67 = scmp.ne.s32.totalorder %s58, %s59
      %p68 = scmp.eq.s32.totalorder %s27, 0
      %p69 = por %p67, %p68
      %p70 = scmp.ne.s32.totalorder %s58, %s59
      %p71 = scmp.eq.s32.totalorder %s28, 1
      %p72 = por %p70, %p71
      %p74 = scmp.ne.s32.totalorder %s59, %s73
      %p75 = scmp.eq.s32.totalorder %s28, 0
      %p76 = por %p74, %p75
      %s78 = sadd.s32 %s77, 1
      %p81 = scmp.eq.s32.totalorder %s22, 1
      %p82 = scmp.ne.s32.totalorder %s77, %s79
      %p83 = scmp.eq.s32.totalorder %s22, 0
      %p84 = por %p82, %p83
      %p85 = scmp.ne.s32.totalorder %s77, %s79
      %p86 = scmp.eq.s32.totalorder %s27, 1
      %p87 = por %p85, %p86
      %p88 = scmp.ne.s32.totalorder %s79, %s80
      %p89 = scmp.eq.s32.totalorder %s27, 0
      %p90 = por %p88, %p89
      %p91 = scmp.ne.s32.totalorder %s79, %s80
      %p92 = scmp.eq.s32.totalorder %s28, 1
      %p93 = por %p91, %p92
      %p95 = scmp.ne.s32.totalorder %s80, %s94
      %p96 = scmp.eq.s32.totalorder %s28, 0
      %p97 = por %p95, %p96
      %s99 = sadd.s32 %s98, 1
      %p102 = scmp.eq.s32.totalorder %s22, 1
      %p103 = scmp.ne.s32.totalorder %s98, %s100
      %p104 = scmp.eq.s32.totalorder %s22, 0
      %p105 = por %p103, %p104
      %p106 = scmp.ne.s32.totalorder %s98, %s100
      %p107 = scmp.eq.s32.totalorder %s27, 1
      %p108 = por %p106, %p107
      %p109 = scmp.ne.s32.totalorder %s100, %s101
      %p110 = scmp.eq.s32.totalorder %s27, 0
      %p111 = por %p109, %p110
      %p112 = scmp.ne.s32.totalorder %s100, %s101
      %p113 = scmp.eq.s32.totalorder %s28, 1
      %p114 = por %p112, %p113
      %p116 = scmp.ne.s32.totalorder %s101, %s115
      %p117 = scmp.eq.s32.totalorder %s28, 0
      %p118 = por %p116, %p117
      %s120 = sadd.s32 %s119, 1
      %p123 = scmp.eq.s32.totalorder %s22, 1
      %p124 = scmp.ne.s32.totalorder %s119, %s121
      %p125 = scmp.eq.s32.totalorder %s22, 0
      %p126 = por %p124, %p125
      %p127 = scmp.ne.s32.totalorder %s119, %s121
      %p128 = scmp.eq.s32.totalorder %s27, 1
      %p129 = por %p127, %p128
      %p130 = scmp.ne.s32.totalorder %s121, %s122
      %p131 = scmp.eq.s32.totalorder %s27, 0
      %p132 = por %p130, %p131
      %p133 = scmp.ne.s32.totalorder %s121, %s122
      %p134 = scmp.eq.s32.totalorder %s28, 1
      %p135 = por %p133, %p134
      %p137 = scmp.ne.s32.totalorder %s122, %s136
      %p138 = scmp.eq.s32.totalorder %s28, 0
      %p139 = por %p137, %p138
      %s141 = sadd.s32 %s140, 1
      %p144 = scmp.eq.s32.totalorder %s22, 1
      %p145 = scmp.ne.s32.totalorder %s140, %s142
      %p146 = scmp.eq.s32.totalorder %s22, 0
      %p147 = por %p145, %p146
      %p148 = scmp.ne.s32.totalorder %s140, %s142
      %p149 = scmp.eq.s32.totalorder %s27, 1
      %p150 = por %p148, %p149
      %p151 = scmp.ne.s32.totalorder %s142, %s143
      %p152 = scmp.eq.s32.totalorder %s27, 0
      %p153 = por %p151, %p152
      %p154 = scmp.ne.s32.totalorder %s142, %s143
      %p155 = scmp.eq.s32.totalorder %s28, 1
      %p156 = por %p154, %p155
      %p158 = scmp.ne.s32.totalorder %s143, %s157
      %p159 = scmp.eq.s32.totalorder %s28, 0
      %p160 = por %p158, %p159
      %s162 = sadd.s32 %s161, 1
      %p165 = scmp.eq.s32.totalorder %s22, 1
      %p166 = scmp.ne.s32.totalorder %s161, %s163
      %p167 = scmp.eq.s32.totalorder %s22, 0
      %p168 = por %p166, %p167
      %p169 = scmp.ne.s32.totalorder %s161, %s163
      %p170 = scmp.eq.s32.totalorder %s27, 1
      %p171 = por %p169, %p170
      %p172 = scmp.ne.s32.totalorder %s163, %s164
      %p173 = scmp.eq.s32.totalorder %s27, 0
      %p174 = por %p172, %p173
      %p175 = scmp.ne.s32.totalorder %s163, %s164
      %p176 = scmp.eq.s32.totalorder %s28, 1
      %p177 = por %p175, %p176
      %p179 = scmp.ne.s32.totalorder %s164, %s178
      %p180 = scmp.eq.s32.totalorder %s28, 0
      %p181 = por %p179, %p180
      %s183 = sadd.s32 %s182, 1
      %p186 = scmp.eq.s32.totalorder %s22, 1
      %p187 = scmp.ne.s32.totalorder %s182, %s184
      %p188 = scmp.eq.s32.totalorder %s22, 0
      %p189 = por %p187, %p188
      %p190 = scmp.ne.s32.totalorder %s182, %s184
      %p191 = scmp.eq.s32.totalorder %s27, 1
      %p192 = por %p190, %p191
      %p193 = scmp.ne.s32.totalorder %s184, %s185
      %p194 = scmp.eq.s32.totalorder %s27, 0
      %p195 = por %p193, %p194
      %p196 = scmp.ne.s32.totalorder %s184, %s185
      %p197 = scmp.eq.s32.totalorder %s28, 1
      %p198 = por %p196, %p197
      %p200 = scmp.ne.s32.totalorder %s185, %s199
      %p201 = scmp.eq.s32.totalorder %s28, 0
      %p202 = por %p200, %p201
      %s204 = sadd.s32 %s203, 1
      %p207 = scmp.eq.s32.totalorder %s22, 1
      %p208 = scmp.ne.s32.totalorder %s203, %s205
      %p209 = scmp.eq.s32.totalorder %s22, 0
      %p210 = por %p208, %p209
      %p211 = scmp.ne.s32.totalorder %s203, %s205
      %p212 = scmp.eq.s32.totalorder %s27, 1
      %p213 = por %p211, %p212
      %p214 = scmp.ne.s32.totalorder %s205, %s206
      %p215 = scmp.eq.s32.totalorder %s27, 0
      %p216 = por %p214, %p215
      %p217 = scmp.ne.s32.totalorder %s205, %s206
      %p218 = scmp.eq.s32.totalorder %s28, 1
      %p219 = por %p217, %p218
      %p221 = scmp.ne.s32.totalorder %s206, %s220
      %p222 = scmp.eq.s32.totalorder %s28, 0
      %p223 = por %p221, %p222
      %s225 = sadd.s32 %s224, 1
      %p228 = scmp.eq.s32.totalorder %s22, 1
      %p229 = scmp.ne.s32.totalorder %s224, %s226
      %p230 = scmp.eq.s32.totalorder %s22, 0
      %p231 = por %p229, %p230
      %p232 = scmp.ne.s32.totalorder %s224, %s226
      %p233 = scmp.eq.s32.totalorder %s27, 1
      %p234 = por %p232, %p233
      %p235 = scmp.ne.s32.totalorder %s226, %s227
      %p236 = scmp.eq.s32.totalorder %s27, 0
      %p237 = por %p235, %p236
      %p238 = scmp.ne.s32.totalorder %s226, %s227
      %p239 = scmp.eq.s32.totalorder %s28, 1
      %p240 = por %p238, %p239
      %p242 = scmp.ne.s32.totalorder %s227, %s241
      %p243 = scmp.eq.s32.totalorder %s28, 0
      %p244 = por %p242, %p243
      %s246 = sadd.s32 %s245, 1
      %p249 = scmp.eq.s32.totalorder %s22, 1
      %p250 = scmp.ne.s32.totalorder %s245, %s247
      %p251 = scmp.eq.s32.totalorder %s22, 0
      %p252 = por %p250, %p251
      %p253 = scmp.ne.s32.totalorder %s245, %s247
      %p254 = scmp.eq.s32.totalorder %s27, 1
      %p255 = por %p253, %p254
      %p256 = scmp.ne.s32.totalorder %s247, %s248
      %p257 = scmp.eq.s32.totalorder %s27, 0
      %p258 = por %p256, %p257
      %p259 = scmp.ne.s32.totalorder %s247, %s248
      %p260 = scmp.eq.s32.totalorder %s28, 1
      %p261 = por %p259, %p260
      %p263 = scmp.ne.s32.totalorder %s248, %s262
      %p264 = scmp.eq.s32.totalorder %s28, 0
      %p265 = por %p263, %p264
      %s267 = sadd.s32 %s266, 1
      %p270 = scmp.eq.s32.totalorder %s22, 1
      %p271 = scmp.ne.s32.totalorder %s266, %s268
      %p272 = scmp.eq.s32.totalorder %s22, 0
      %p273 = por %p271, %p272
      %p274 = scmp.ne.s32.totalorder %s266, %s268
      %p275 = scmp.eq.s32.totalorder %s27, 1
      %p276 = por %p274, %p275
      %p277 = scmp.ne.s32.totalorder %s268, %s269
      %p278 = scmp.eq.s32.totalorder %s27, 0
      %p279 = por %p277, %p278
      %p280 = scmp.ne.s32.totalorder %s268, %s269
      %p281 = scmp.eq.s32.totalorder %s28, 1
      %p282 = por %p280, %p281
      %p284 = scmp.ne.s32.totalorder %s269, %s283
      %p285 = scmp.eq.s32.totalorder %s28, 0
      %p286 = por %p284, %p285
      %s288 = sadd.s32 %s287, 1
      %p291 = scmp.eq.s32.totalorder %s22, 1
      %p292 = scmp.ne.s32.totalorder %s287, %s289
      %p293 = scmp.eq.s32.totalorder %s22, 0
      %p294 = por %p292, %p293
      %p295 = scmp.ne.s32.totalorder %s287, %s289
      %p296 = scmp.eq.s32.totalorder %s27, 1
      %p297 = por %p295, %p296
      %p298 = scmp.ne.s32.totalorder %s289, %s290
      %p299 = scmp.eq.s32.totalorder %s27, 0
      %p300 = por %p298, %p299
      %p301 = scmp.ne.s32.totalorder %s289, %s290
      %p302 = scmp.eq.s32.totalorder %s28, 1
      %p303 = por %p301, %p302
      %p305 = scmp.ne.s32.totalorder %s290, %s304
      %p306 = scmp.eq.s32.totalorder %s28, 0
      %p307 = por %p305, %p306
      %s308 = ssub.s32 %s22, %s29
      %p309 = scmp.eq.s32.totalorder %s308, 0
      %s311 = sadd.s32 %s310, 1
      %s312 = scalar_select %p309, %s310, %s311
      %p315 = pneg %p309
      %p316 = scmp.eq.s32.totalorder %s22, 1
      %p317 = por %p315, %p316
      %p318 = scmp.ne.s32.totalorder %s310, %s313
      %p319 = scmp.eq.s32.totalorder %s22, 0
      %p320 = por %p318, %p319
      %p321 = scmp.ne.s32.totalorder %s310, %s313
      %p322 = scmp.eq.s32.totalorder %s27, 1
      %p323 = por %p321, %p322
      %p324 = scmp.ne.s32.totalorder %s313, %s314
      %p325 = scmp.eq.s32.totalorder %s27, 0
      %p326 = por %p324, %p325
      %p327 = scmp.ne.s32.totalorder %s313, %s314
      %p328 = scmp.eq.s32.totalorder %s28, 1
      %p329 = por %p327, %p328
      %p331 = scmp.ne.s32.totalorder %s314, %s330
      %p332 = scmp.eq.s32.totalorder %s28, 0
      %p333 = por %p331, %p332
      %p334 = scmp.le.s32.totalorder 1, %s22
      %p335 = scmp.lt.s32.totalorder %s22, 3
      %p336 = pnand %p334, %p335
      %p337 = pneg %p336
      // Predicated region
      $region9: #{_encode.3} parent=5 // pred_check
        _
      $region10: #{_encode.3} parent=5 // pred_check_branch
        %339 = sbr.rel (%p336) target = $region12
      $region11: #{_encode.3} parent=5 // pred_region
        %s340 = ssub.s32 %s22, 1
        // Predicated region
        $region13: #{_encode.3} parent=11 // pred_check
          %p341 = pneg %p69
        $region14: #{_encode.3} parent=11 // pred_check_branch
          %343 = sbr.rel (%p341) target = $region16
        $region15: #{_encode.3} parent=11 // pred_region
          _
        $region16: #{_encode.3} parent=11 // pred_fallthru
          _
        // Predicated region
        $region17: #{_encode.3} parent=11 // pred_check
          %p344 = pneg %p90
        $region18: #{_encode.3} parent=11 // pred_check_branch
          %346 = sbr.rel (%p344) target = $region20
        $region19: #{_encode.3} parent=11 // pred_region
          _
        $region20: #{_encode.3} parent=11 // pred_fallthru
          _
        // Predicated region
        $region21: #{_encode.3} parent=11 // pred_check
          %p347 = pneg %p111
        $region22: #{_encode.3} parent=11 // pred_check_branch
          %349 = sbr.rel (%p347) target = $region24
        $region23: #{_encode.3} parent=11 // pred_region
          _
        $region24: #{_encode.3} parent=11 // pred_fallthru
          _
        // Predicated region
        $region25: #{_encode.3} parent=11 // pred_check
          %p350 = pneg %p132
        $region26: #{_encode.3} parent=11 // pred_check_branch
          %352 = sbr.rel (%p350) target = $region28
        $region27: #{_encode.3} parent=11 // pred_region
          _
        $region28: #{_encode.3} parent=11 // pred_fallthru
          _
        // Predicated region
        $region29: #{_encode.3} parent=11 // pred_check
          %p353 = pneg %p153
        $region30: #{_encode.3} parent=11 // pred_check_branch
          %355 = sbr.rel (%p353) target = $region32
        $region31: #{_encode.3} parent=11 // pred_region
          _
        $region32: #{_encode.3} parent=11 // pred_fallthru
          _
        // Predicated region
        $region33: #{_encode.3} parent=11 // pred_check
          %p356 = pneg %p174
        $region34: #{_encode.3} parent=11 // pred_check_branch
          %358 = sbr.rel (%p356) target = $region36
        $region35: #{_encode.3} parent=11 // pred_region
          _
        $region36: #{_encode.3} parent=11 // pred_fallthru
          _
        // Predicated region
        $region37: #{_encode.3} parent=11 // pred_check
          %p359 = pneg %p195
        $region38: #{_encode.3} parent=11 // pred_check_branch
          %361 = sbr.rel (%p359) target = $region40
        $region39: #{_encode.3} parent=11 // pred_region
          _
        $region40: #{_encode.3} parent=11 // pred_fallthru
          _
        // Predicated region
        $region41: #{_encode.3} parent=11 // pred_check
          %p362 = pneg %p216
        $region42: #{_encode.3} parent=11 // pred_check_branch
          %364 = sbr.rel (%p362) target = $region44
        $region43: #{_encode.3} parent=11 // pred_region
          _
        $region44: #{_encode.3} parent=11 // pred_fallthru
          _
        // Predicated region
        $region45: #{_encode.3} parent=11 // pred_check
          %p365 = pneg %p237
        $region46: #{_encode.3} parent=11 // pred_check_branch
          %367 = sbr.rel (%p365) target = $region48
        $region47: #{_encode.3} parent=11 // pred_region
          _
        $region48: #{_encode.3} parent=11 // pred_fallthru
          _
        // Predicated region
        $region49: #{_encode.3} parent=11 // pred_check
          %p368 = pneg %p258
        $region50: #{_encode.3} parent=11 // pred_check_branch
          %370 = sbr.rel (%p368) target = $region52
        $region51: #{_encode.3} parent=11 // pred_region
          _
        $region52: #{_encode.3} parent=11 // pred_fallthru
          _
        // Predicated region
        $region53: #{_encode.3} parent=11 // pred_check
          %p371 = pneg %p279
        $region54: #{_encode.3} parent=11 // pred_check_branch
          %373 = sbr.rel (%p371) target = $region56
        $region55: #{_encode.3} parent=11 // pred_region
          _
        $region56: #{_encode.3} parent=11 // pred_fallthru
          _
        // Predicated region
        $region57: #{_encode.3} parent=11 // pred_check
          %p374 = pneg %p300
        $region58: #{_encode.3} parent=11 // pred_check_branch
          %376 = sbr.rel (%p374) target = $region60
        $region59: #{_encode.3} parent=11 // pred_region
          _
        $region60: #{_encode.3} parent=11 // pred_fallthru
          _
      $region12: #{_encode.3} parent=5 // pred_fallthru
        _
      %p377 = scmp.lt.s32.totalorder %s22, 2
      // Predicated region
      $region61: #{_encode.3} parent=5 // pred_check
        %p378 = pneg %p377
      $region62: #{_encode.3} parent=5 // pred_check_branch
        %380 = sbr.rel (%p378) target = $region64
      $region63: #{_encode.3} parent=5 // pred_region
        // Predicated region
        $region65: #{_encode.3} parent=63 // pred_check
          %p381 = pneg %p42
        $region66: #{_encode.3} parent=63 // pred_check_branch
          %383 = sbr.rel (%p381) target = $region68
        $region67: #{_encode.3} parent=63 // pred_region
          %p384 = scmp.lt.s32.totalorder %s22, 1
          %s385 = scalar_select %p384, %s22, 1
          %s386 = smul.addr %s385, 8
          %s387 = scalar_lea.vmem %s0, %s386
        $region68: #{_encode.3} parent=63 // pred_fallthru
          _
      $region64: #{_encode.3} parent=5 // pred_fallthru
        _
      %p388 = scmp.le.s32.totalorder 1, %s22
      %p389 = scmp.lt.s32.totalorder %s22, 3
      %p390 = pnand %p388, %p389
      %p391 = pneg %p390
      // Predicated region
      $region69: #{_encode.3} parent=5 // pred_check
        _
      $region70: #{_encode.3} parent=5 // pred_check_branch
        %393 = sbr.rel (%p390) target = $region72
      $region71: #{_encode.3} parent=5 // pred_region
        %s394 = ssub.s32 %s22, 1
        %p395 = scmp.lt.s32.totalorder %s27, 1
        %s396 = scalar_select %p395, %s27, 1
        %s397 = smul.addr %s396, 8
        %s398 = scalar_lea.vmem %s0, %s397
        %p399 = pneg %p48
        %p400 = pneg %p45
        %p401 = pneg %p69
        %p402 = pneg %p66
        %p403 = pneg %p90
        %p404 = pneg %p87
        %p405 = pneg %p111
        %p406 = pneg %p108
        %p407 = pneg %p132
        %p408 = pneg %p129
        %p409 = pneg %p153
        %p410 = pneg %p150
        %p411 = pneg %p174
        %p412 = pneg %p171
        %p413 = pneg %p195
        %p414 = pneg %p192
        %p415 = pneg %p216
        %p416 = pneg %p213
        %p417 = pneg %p237
        %p418 = pneg %p234
        %p419 = pneg %p258
        %p420 = pneg %p255
        %p421 = pneg %p279
        %p422 = pneg %p276
        %p423 = pneg %p300
        %p424 = pneg %p297
        %p425 = pneg %p326
        %p426 = pneg %p323
        %s427 = sand.u32 %s313, 1
        %s428 = scalar_lea.sflag [#allocation3], %s427
        %s429 = sand.u32 %s313, 1
        %s430 = smul.addr %s429, 8
        %s431 = scalar_lea.vmem [#allocation2], %s430
        %p432 = scmp.lt.s32.totalorder %s27, 1
        %s433 = scalar_select %p432, %s27, 1
        %s434 = smul.addr %s433, 8
        %s435 = scalar_lea.vmem %s0, %s434
        %v437 = vld [vmem:[%s435] sm:$0xff]
        %v438 = vpack.c.bf16 %v437, %v437
        %v439 = vlaneseq
        %v440 = vshrl.u32 %v439, 7
        %v441 = vlaneseq
        %v442 = vand.u32 %v441, 127
        %vm443 = vcmp.le.s32.totalorder %v442, %v440
        %v444 = vsel %vm443, 0.0, -10000.0
        loop: start=0, step=1, limit=4
        $region73: #{_encode.3} parent=71 // loop_pre_header
          _
        $region74: #{_encode.3} parent=71 // loop_header
          %s446 = sphi 0, %s450
          %p447 = scmp.ge.s32.totalorder %s446, 4
          %v451 = vphi 0.0, %v685
        $region75: #{_encode.3} parent=71 // loop_header_branch
          %449 = sbr.rel (%p447) target = $region79
        $region76: #{_encode.3} parent=71 // loop_body
          %s452 = smul.u32 %s446, 4
          %s453 = smul.addr %s452, 4
          %s454 = scalar_lea.vmem %s1, %s453
          %v455 = vld [vmem:[%s454] sm:$0xf]
          %v456 = vld [vmem:[%s454 + $0x4] sm:$0xf]
          %v457 = vld [vmem:[%s454 + $0x8] sm:$0xf]
          %v458 = vld [vmem:[%s454 + $0xc] sm:$0xf]
          %s459 = scalar_lea.vmem %s2, %s446
          %v460 = vld [vmem:[%s459] sm:$0x1]
          %v462 = vlaneseq
          %v463 = vshrl.u32 %v462, 7
          %v464 = vsub.s32 0, %v463
          %v465 = vrot.slane %v460, %v464
          %v471 = vunpack.c.l.b16 %v455
          %v472 = vunpack.c.l.b16 %v456
          %v473 = vunpack.c.l.b16 %v457
          %v474 = vunpack.c.l.b16 %v458
          %v475 = vpack.c.b16 %v472, %v471
          %v476 = vpack.c.b16 %v474, %v473
          %vm479 = vcmask 261120
          %v481 = vsel %vm479, %v438, 0
          %483 = vmatprep.subr.bf16.mxu0 0
          %484 = vmatpush1.bf16.msra.mxu0 %v475
          %485 = vmatprep.subr.bf16.mxu0 0
          %486 = vmatpush1.bf16.msra.mxu0 %v476
          %487 = vmatprep.subr.bf16.mxu0 0
          %488 = vmatpush1.bf16.msra.mxu0 0
          %489 = vmatprep.subr.bf16.mxu0 0
          %490 = vmatpush1.bf16.msra.mxu0 0
          %491 = vmatprep.subr.bf16.mxu0 0
          %492 = vmatpush1.bf16.msra.mxu0 0
          %493 = vmatprep.subr.bf16.mxu0 0
          %494 = vmatpush1.bf16.msra.mxu0 0
          %495 = vmatprep.subr.bf16.mxu0 0
          %496 = vmatpush1.bf16.msra.mxu0 0
          %497 = vmatprep.subr.bf16.mxu0 0
          %498 = vmatpush1.bf16.msra.mxu0 0
          %499 = vmatprep.subr.bf16.mxu0 0
          %500 = vmatpush1.bf16.msra.mxu0 0
          %501 = vmatprep.subr.bf16.mxu0 0
          %502 = vmatpush1.bf16.msra.mxu0 0
          %503 = vmatprep.subr.bf16.mxu0 0
          %504 = vmatpush1.bf16.msra.mxu0 0
          %505 = vmatprep.subr.bf16.mxu0 0
          %506 = vmatpush1.bf16.msra.mxu0 0
          %507 = vmatprep.subr.bf16.mxu0 0
          %508 = vmatpush1.bf16.msra.mxu0 0
          %509 = vmatprep.subr.bf16.mxu0 0
          %510 = vmatpush1.bf16.msra.mxu0 0
          %511 = vmatprep.subr.bf16.mxu0 0
          %512 = vmatpush1.bf16.msra.mxu0 0
          %513 = vmatprep.subr.bf16.mxu0 0
          %514 = vmatpush1.bf16.msra.mxu0 0
          %515 = vmatprep.mubr.bf16.mxu0 0
          %516 = vmatmul.mubr.bf16.gmra.mrb[0].mxu0 %v481
          %v517 = vpop.f32.mrb[0].mxu0
          %v518 = vadd.f32 %v465, %v517
          %v519 = vpop.f32.mrb[0].mxu0
          %v520 = vpop.f32.mrb[0].mxu0
          %v521 = vpop.f32.mrb[0].mxu0
          %522 = vdwg.mxu0
          %v523 = vpack.c.bf16 %v518, %v518
          %525 = vrot.lane.b32.xlu0 %v523, 120
          %v526 = vpop.permute.xlu0 %525
          %vm527 = vcmask 64512
          %v529 = vsel %vm527, %v523, 0
          %v532 = vsel %vm527, %v526, 0
          %534 = vmatprep.subr.bf16.mxu0 0
          %535 = vmatpush1.bf16.xpose.msra.mxu0 %v532
          %536 = vmatprep.subr.bf16.mxu0 0
          %537 = vmatpush1.bf16.xpose.msra.mxu0 0
          %538 = vmatprep.subr.bf16.mxu0 0
          %539 = vmatpush1.bf16.xpose.msra.mxu0 0
          %540 = vmatprep.subr.bf16.mxu0 0
          %541 = vmatpush1.bf16.xpose.msra.mxu0 0
          %542 = vmatprep.subr.bf16.mxu0 0
          %543 = vmatpush1.bf16.xpose.msra.mxu0 0
          %544 = vmatprep.subr.bf16.mxu0 0
          %545 = vmatpush1.bf16.xpose.msra.mxu0 0
          %546 = vmatprep.subr.bf16.mxu0 0
          %547 = vmatpush1.bf16.xpose.msra.mxu0 0
          %548 = vmatprep.subr.bf16.mxu0 0
          %549 = vmatpush1.bf16.xpose.msra.mxu0 0
          %550 = vmatprep.subr.bf16.mxu0 0
          %551 = vmatpush1.bf16.xpose.msra.mxu0 0
          %552 = vmatprep.subr.bf16.mxu0 0
          %553 = vmatpush1.bf16.xpose.msra.mxu0 0
          %554 = vmatprep.subr.bf16.mxu0 0
          %555 = vmatpush1.bf16.xpose.msra.mxu0 0
          %556 = vmatprep.subr.bf16.mxu0 0
          %557 = vmatpush1.bf16.xpose.msra.mxu0 0
          %558 = vmatprep.subr.bf16.mxu0 0
          %559 = vmatpush1.bf16.xpose.msra.mxu0 0
          %560 = vmatprep.subr.bf16.mxu0 0
          %561 = vmatpush1.bf16.xpose.msra.mxu0 0
          %562 = vmatprep.subr.bf16.mxu0 0
          %563 = vmatpush1.bf16.xpose.msra.mxu0 0
          %564 = vmatprep.subr.bf16.mxu0 0
          %565 = vmatpush1.bf16.xpose.msra.mxu0 0
          %566 = vmatprep.mubr.bf16.mxu0 0
          %567 = vmatmul.mubr.bf16.gmra.mrb[0].mxu0 %v529
          %v568 = vpop.f32.mrb[0].mxu0
          %v569 = vadd.f32 %v444, %v568
          %v570 = vpop.f32.mrb[0].mxu0
          %v571 = vpop.f32.mrb[0].mxu0
          %v572 = vpop.f32.mrb[0].mxu0
          %573 = vdwg.mxu0
          %v574 = vsel %vm527, %v569, -inf
          %575 = vmax.xlane.f32.xlu0 %v574
          %v576 = vpop.xlane.xlu0 %575
          %v577 = vsub.f32 %v569, %v576
          %v578 = vmul.f32 %v577, 1.442695
          %v579 = vpow.pop %v578
          %v580 = vsel %vm527, %v579, 0.0
          %581 = vadd.xlane.f32.xlu0 %v580
          %v582 = vpop.xlane.xlu0 %581
          %v583 = vrcp.pop %v582
          %v584 = vmul.f32 %v579, %v583
          %v585 = vpack.c.bf16 %v584, %v584
          %586 = vrot.lane.b32.xlu0 %v523, 112
          %v587 = vpop.permute.xlu0 %586
          %v589 = vsel %vm527, %v585, 0
          %vm591 = vcmask 1043456
          %v593 = vsel %vm591, %v587, 0
          %595 = vmatprep.subr.bf16.mxu0 0
          %596 = vmatpush1.bf16.msra.mxu0 %v593
          %597 = vmatprep.subr.bf16.mxu0 0
          %598 = vmatpush1.bf16.msra.mxu0 0
          %599 = vmatprep.subr.bf16.mxu0 0
          %600 = vmatpush1.bf16.msra.mxu0 0
          %601 = vmatprep.subr.bf16.mxu0 0
          %602 = vmatpush1.bf16.msra.mxu0 0
          %603 = vmatprep.subr.bf16.mxu0 0
          %604 = vmatpush1.bf16.msra.mxu0 0
          %605 = vmatprep.subr.bf16.mxu0 0
          %606 = vmatpush1.bf16.msra.mxu0 0
          %607 = vmatprep.subr.bf16.mxu0 0
          %608 = vmatpush1.bf16.msra.mxu0 0
          %609 = vmatprep.subr.bf16.mxu0 0
          %610 = vmatpush1.bf16.msra.mxu0 0
          %611 = vmatprep.subr.bf16.mxu0 0
          %612 = vmatpush1.bf16.msra.mxu0 0
          %613 = vmatprep.subr.bf16.mxu0 0
          %614 = vmatpush1.bf16.msra.mxu0 0
          %615 = vmatprep.subr.bf16.mxu0 0
          %616 = vmatpush1.bf16.msra.mxu0 0
          %617 = vmatprep.subr.bf16.mxu0 0
          %618 = vmatpush1.bf16.msra.mxu0 0
          %619 = vmatprep.subr.bf16.mxu0 0
          %620 = vmatpush1.bf16.msra.mxu0 0
          %621 = vmatprep.subr.bf16.mxu0 0
          %622 = vmatpush1.bf16.msra.mxu0 0
          %623 = vmatprep.subr.bf16.mxu0 0
          %624 = vmatpush1.bf16.msra.mxu0 0
          %625 = vmatprep.subr.bf16.mxu0 0
          %626 = vmatpush1.bf16.msra.mxu0 0
          %627 = vmatprep.mubr.bf16.mxu0 0
          %628 = vmatmul.mubr.bf16.gmra.mrb[0].mxu0 %v589
          %v629 = vpop.f32.mrb[0].mxu0
          %v630 = vadd.f32 0.0, %v629
          %v631 = vpop.f32.mrb[0].mxu0
          %v632 = vpop.f32.mrb[0].mxu0
          %v633 = vpop.f32.mrb[0].mxu0
          %634 = vdwg.mxu0
          %v635 = vpack.c.bf16 %v630, %v630
          %s636 = smul.addr %s446, 4
          %s637 = scalar_lea.vmem %s3, %s636
          %v638 = vld [vmem:[%s637] sm:$0xf]
          %v640 = vsel %vm527, %v635, 0
          %v643 = vsel %vm591, %v638, 0
          %645 = vmatprep.subr.bf16.mxu0 0
          %646 = vmatpush1.bf16.msra.mxu0 %v643
          %647 = vmatprep.subr.bf16.mxu0 0
          %648 = vmatpush1.bf16.msra.mxu0 0
          %649 = vmatprep.subr.bf16.mxu0 0
          %650 = vmatpush1.bf16.msra.mxu0 0
          %651 = vmatprep.subr.bf16.mxu0 0
          %652 = vmatpush1.bf16.msra.mxu0 0
          %653 = vmatprep.subr.bf16.mxu0 0
          %654 = vmatpush1.bf16.msra.mxu0 0
          %655 = vmatprep.subr.bf16.mxu0 0
          %656 = vmatpush1.bf16.msra.mxu0 0
          %657 = vmatprep.subr.bf16.mxu0 0
          %658 = vmatpush1.bf16.msra.mxu0 0
          %659 = vmatprep.subr.bf16.mxu0 0
          %660 = vmatpush1.bf16.msra.mxu0 0
          %661 = vmatprep.subr.bf16.mxu0 0
          %662 = vmatpush1.bf16.msra.mxu0 0
          %663 = vmatprep.subr.bf16.mxu0 0
          %664 = vmatpush1.bf16.msra.mxu0 0
          %665 = vmatprep.subr.bf16.mxu0 0
          %666 = vmatpush1.bf16.msra.mxu0 0
          %667 = vmatprep.subr.bf16.mxu0 0
          %668 = vmatpush1.bf16.msra.mxu0 0
          %669 = vmatprep.subr.bf16.mxu0 0
          %670 = vmatpush1.bf16.msra.mxu0 0
          %671 = vmatprep.subr.bf16.mxu0 0
          %672 = vmatpush1.bf16.msra.mxu0 0
          %673 = vmatprep.subr.bf16.mxu0 0
          %674 = vmatpush1.bf16.msra.mxu0 0
          %675 = vmatprep.subr.bf16.mxu0 0
          %676 = vmatpush1.bf16.msra.mxu0 0
          %677 = vmatprep.mubr.bf16.mxu0 0
          %678 = vmatmul.mubr.bf16.gmra.mrb[0].mxu0 %v640
          %v679 = vpop.f32.mrb[0].mxu0
          %v680 = vadd.f32 0.0, %v679
          %v681 = vpop.f32.mrb[0].mxu0
          %v682 = vpop.f32.mrb[0].mxu0
          %v683 = vpop.f32.mrb[0].mxu0
          %684 = vdwg.mxu0
          %v685 = vadd.f32 %v451, %v680
        $region77: #{_encode.3} parent=71 // loop_footer
          %s450 = sadd.s32 1, %s446
        $region78: #{_encode.3} parent=71 // loop_footer_branch
          %445 = sbr.rel target = $region74
        $region79: #{_encode.3} parent=71 // loop_exit
          _
        %v686 = vld [vmem:[%s4] sm:$0x1]
        %v688 = vlaneseq
        %v689 = vshrl.u32 %v688, 7
        %v690 = vsub.s32 0, %v689
        %v691 = vrot.slane %v686, %v690
        %v693 = vadd.f32 %v451, %v691
        %v694 = vadd.f32 %v693, %v437
        %v695 = vld [vmem:[%s5] sm:$0x1]
        %v696 = vld [vmem:[%s6] sm:$0x1]
        %vm697 = vcmask 261120
        %v698 = vsel %vm697, %v694, 0.0
        %699 = vadd.xlane.f32.xlu0 %v698
        %v700 = vpop.xlane.xlu0 %699
        %v701 = vrcp.pop 32.0
        %v702 = vmul.f32 %v700, %v701
        %v703 = vsub.f32 %v694, %v702
        %v704 = vmul.f32 %v703, %v703
        %v705 = vsel %vm697, %v704, 0.0
        %706 = vadd.xlane.f32.xlu0 %v705
        %v707 = vpop.xlane.xlu0 %706
        %v708 = vrcp.pop 31.0
        %v709 = vmul.f32 %v707, %v708
        %v710 = vrsqrt.pop %v709
        %v711 = vmul.f32 %v709, %v710
        %vm712 = vcmp.eq.f32.partialorder %v709, inf
        %v713 = vsel %vm712, %v709, %v711
        %vm714 = vcmp.eq.f32.partialorder %v709, 0.0
        %v715 = vand.u32 %v709, 2147483648
        %v716 = vsel %vm714, %v715, %v713
        %v717 = vadd.f32 %v716, 1e-06
        %v718 = vrcp.pop %v717
        %v719 = vmul.f32 1.0, %v718
        %v721 = vlaneseq
        %v722 = vshrl.u32 %v721, 7
        %v723 = vsub.s32 0, %v722
        %v724 = vrot.slane %v695, %v723
        %v726 = vmul.f32 %v724, %v703
        %v727 = vmul.f32 %v726, %v719
        %v729 = vlaneseq
        %v730 = vshrl.u32 %v729, 7
        %v731 = vsub.s32 0, %v730
        %v732 = vrot.slane %v696, %v731
        %v734 = vadd.f32 %v727, %v732
        %v735 = vpack.c.bf16 %v734, %v734
        %v736 = vld [vmem:[%s7] sm:$0xf]
        %v737 = vld [vmem:[%s7 + $0x4] sm:$0xf]
        %v738 = vld [vmem:[%s7 + $0x8] sm:$0xf]
        %v739 = vld [vmem:[%s7 + $0xc] sm:$0xf]
        %v740 = vld [vmem:[%s8] sm:$0x1]
        %v742 = vlaneseq
        %v743 = vshrl.u32 %v742, 7
        %v744 = vsub.s32 0, %v743
        %v745 = vrot.slane %v740, %v744
        %v751 = vunpack.c.l.b16 %v736
        %v752 = vunpack.c.l.b16 %v737
        %v753 = vunpack.c.l.b16 %v738
        %v754 = vunpack.c.l.b16 %v739
        %v755 = vpack.c.b16 %v752, %v751
        %v756 = vpack.c.b16 %v754, %v753
        %v760 = vsel %vm697, %v735, 0
        %762 = vmatprep.subr.bf16.mxu0 0
        %763 = vmatpush1.bf16.msra.mxu0 %v755
        %764 = vmatprep.subr.bf16.mxu0 0
        %765 = vmatpush1.bf16.msra.mxu0 %v756
        %766 = vmatprep.subr.bf16.mxu0 0
        %767 = vmatpush1.bf16.msra.mxu0 0
        %768 = vmatprep.subr.bf16.mxu0 0
        %769 = vmatpush1.bf16.msra.mxu0 0
        %770 = vmatprep.subr.bf16.mxu0 0
        %771 = vmatpush1.bf16.msra.mxu0 0
        %772 = vmatprep.subr.bf16.mxu0 0
        %773 = vmatpush1.bf16.msra.mxu0 0
        %774 = vmatprep.subr.bf16.mxu0 0
        %775 = vmatpush1.bf16.msra.mxu0 0
        %776 = vmatprep.subr.bf16.mxu0 0
        %777 = vmatpush1.bf16.msra.mxu0 0
        %778 = vmatprep.subr.bf16.mxu0 0
        %779 = vmatpush1.bf16.msra.mxu0 0
        %780 = vmatprep.subr.bf16.mxu0 0
        %781 = vmatpush1.bf16.msra.mxu0 0
        %782 = vmatprep.subr.bf16.mxu0 0
        %783 = vmatpush1.bf16.msra.mxu0 0
        %784 = vmatprep.subr.bf16.mxu0 0
        %785 = vmatpush1.bf16.msra.mxu0 0
        %786 = vmatprep.subr.bf16.mxu0 0
        %787 = vmatpush1.bf16.msra.mxu0 0
        %788 = vmatprep.subr.bf16.mxu0 0
        %789 = vmatpush1.bf16.msra.mxu0 0
        %790 = vmatprep.subr.bf16.mxu0 0
        %791 = vmatpush1.bf16.msra.mxu0 0
        %792 = vmatprep.subr.bf16.mxu0 0
        %793 = vmatpush1.bf16.msra.mxu0 0
        %794 = vmatprep.mubr.bf16.mxu0 0
        %795 = vmatmul.mubr.bf16.gmra.mrb[0].mxu0 %v760
        %v796 = vpop.f32.mrb[0].mxu0
        %v797 = vadd.f32 %v745, %v796
        %v798 = vpop.f32.mrb[0].mxu0
        %v799 = vpop.f32.mrb[0].mxu0
        %v800 = vpop.f32.mrb[0].mxu0
        %801 = vdwg.mxu0
        %v802 = vmul.f32 %v797, 0.5
        %v803 = vmul.f32 %v797, 0.70710677
        %v804 = verf.f32.pop %v803
        %v805 = vadd.f32 %v804, 1.0
        %v806 = vmul.f32 %v802, %v805
        %v807 = vpack.c.bf16 %v806, %v806
        %v808 = vld [vmem:[%s9] sm:$0xf]
        %v809 = vld [vmem:[%s9 + $0x4] sm:$0xf]
        %v810 = vld [vmem:[%s9 + $0x8] sm:$0xf]
        %v811 = vld [vmem:[%s9 + $0xc] sm:$0xf]
        %v812 = vld [vmem:[%s9 + $0x10] sm:$0xf]
        %v813 = vld [vmem:[%s9 + $0x14] sm:$0xf]
        %v814 = vld [vmem:[%s9 + $0x18] sm:$0xf]
        %v815 = vld [vmem:[%s9 + $0x1c] sm:$0xf]
        %v816 = vld [vmem:[%s10] sm:$0x1]
        %v818 = vlaneseq
        %v819 = vshrl.u32 %v818, 7
        %v820 = vsub.s32 0, %v819
        %v821 = vrot.slane %v816, %v820
        %v831 = vunpack.c.l.b16 %v808
        %v832 = vunpack.c.l.b16 %v809
        %v833 = vunpack.c.l.b16 %v810
        %v834 = vunpack.c.l.b16 %v811
        %v835 = vunpack.c.l.b16 %v812
        %v836 = vunpack.c.l.b16 %v813
        %v837 = vunpack.c.l.b16 %v814
        %v838 = vunpack.c.l.b16 %v815
        %v839 = vpack.c.b16 %v832, %v831
        %v840 = vpack.c.b16 %v834, %v833
        %v841 = vpack.c.b16 %v836, %v835
        %v842 = vpack.c.b16 %v838, %v837
        %vm847 = vcmask 523264
        %v849 = vsel %vm847, %v807, 0
        %851 = vmatprep.subr.bf16.mxu0 0
        %852 = vmatpush1.bf16.msra.mxu0 %v839
        %853 = vmatprep.subr.bf16.mxu0 0
        %854 = vmatpush1.bf16.msra.mxu0 %v840
        %855 = vmatprep.subr.bf16.mxu0 0
        %856 = vmatpush1.bf16.msra.mxu0 %v841
        %857 = vmatprep.subr.bf16.mxu0 0
        %858 = vmatpush1.bf16.msra.mxu0 %v842
        %859 = vmatprep.subr.bf16.mxu0 0
        %860 = vmatpush1.bf16.msra.mxu0 0
        %861 = vmatprep.subr.bf16.mxu0 0
        %862 = vmatpush1.bf16.msra.mxu0 0
        %863 = vmatprep.subr.bf16.mxu0 0
        %864 = vmatpush1.bf16.msra.mxu0 0
        %865 = vmatprep.subr.bf16.mxu0 0
        %866 = vmatpush1.bf16.msra.mxu0 0
        %867 = vmatprep.subr.bf16.mxu0 0
        %868 = vmatpush1.bf16.msra.mxu0 0
        %869 = vmatprep.subr.bf16.mxu0 0
        %870 = vmatpush1.bf16.msra.mxu0 0
        %871 = vmatprep.subr.bf16.mxu0 0
        %872 = vmatpush1.bf16.msra.mxu0 0
        %873 = vmatprep.subr.bf16.mxu0 0
        %874 = vmatpush1.bf16.msra.mxu0 0
        %875 = vmatprep.subr.bf16.mxu0 0
        %876 = vmatpush1.bf16.msra.mxu0 0
        %877 = vmatprep.subr.bf16.mxu0 0
        %878 = vmatpush1.bf16.msra.mxu0 0
        %879 = vmatprep.subr.bf16.mxu0 0
        %880 = vmatpush1.bf16.msra.mxu0 0
        %881 = vmatprep.subr.bf16.mxu0 0
        %882 = vmatpush1.bf16.msra.mxu0 0
        %883 = vmatprep.mubr.bf16.mxu0 0
        %884 = vmatmul.mubr.bf16.gmra.mrb[0].mxu0 %v849
        %v885 = vpop.f32.mrb[0].mxu0
        %v886 = vadd.f32 %v821, %v885
        %v887 = vpop.f32.mrb[0].mxu0
        %v888 = vpop.f32.mrb[0].mxu0
        %v889 = vpop.f32.mrb[0].mxu0
        %890 = vdwg.mxu0
        %v891 = vadd.f32 %v886, %v734
        %v892 = vld [vmem:[%s11] sm:$0x1]
        %v893 = vld [vmem:[%s12] sm:$0x1]
        %v894 = vsel %vm697, %v891, 0.0
        %895 = vadd.xlane.f32.xlu0 %v894
        %v896 = vpop.xlane.xlu0 %895
        %v897 = vmul.f32 %v896, %v701
        %v898 = vsub.f32 %v891, %v897
        %v899 = vmul.f32 %v898, %v898
        %v900 = vsel %vm697, %v899, 0.0
        %901 = vadd.xlane.f32.xlu0 %v900
        %v902 = vpop.xlane.xlu0 %901
        %v903 = vmul.f32 %v902, %v708
        %v904 = vrsqrt.pop %v903
        %v905 = vmul.f32 %v903, %v904
        %vm906 = vcmp.eq.f32.partialorder %v903, inf
        %v907 = vsel %vm906, %v903, %v905
        %vm908 = vcmp.eq.f32.partialorder %v903, 0.0
        %v909 = vand.u32 %v903, 2147483648
        %v910 = vsel %vm908, %v909, %v907
        %v911 = vadd.f32 %v910, 1e-06
        %v912 = vrcp.pop %v911
        %v913 = vmul.f32 1.0, %v912
        %v915 = vlaneseq
        %v916 = vshrl.u32 %v915, 7
        %v917 = vsub.s32 0, %v916
        %v918 = vrot.slane %v892, %v917
        %v920 = vmul.f32 %v918, %v898
        %v921 = vmul.f32 %v920, %v913
        %v923 = vlaneseq
        %v924 = vshrl.u32 %v923, 7
        %v925 = vsub.s32 0, %v924
        %v926 = vrot.slane %v893, %v925
        %v928 = vadd.f32 %v921, %v926
        %929 = vst.msk [vmem:[%s431] sm:$0xff] %vm697, %v928
        %s930 = sand.u32 %s313, 1
        %s931 = scalar_lea.sflag [#allocation3], %s930
        %s932 = sand.u32 %s313, 1
        %s933 = smul.addr %s932, 8
        %s934 = scalar_lea.vmem [#allocation2], %s933
        // Predicated region
        $region80: #{_encode.3} parent=71 // pred_check
          %p935 = pneg %p323
        $region81: #{_encode.3} parent=71 // pred_check_branch
          %937 = sbr.rel (%p935) target = $region83
        $region82: #{_encode.3} parent=71 // pred_region
          %s939 = ssub.s32 128, 128
          %940 = vsyncadd %s931, %s939
          %s941 = smul.addr %s27, 128
          %s942 = scalar_lea.hbm %s13, %s941
          %s944 = sshll.u32 %s934, 4
          %s945 = int_to_ptr.vmem [resolvable:$true] %s944
          %947 = dma.vmem_to_hbm [thread:$0]  %s945, 128, %s942, %s931
        $region83: #{_encode.3} parent=71 // pred_fallthru
          _
      $region72: #{_encode.3} parent=5 // pred_fallthru
        _
      %p948 = scmp.le.s32.totalorder 2, %s22
      // Predicated region
      $region84: #{_encode.3} parent=5 // pred_check
        %p949 = pneg %p948
      $region85: #{_encode.3} parent=5 // pred_check_branch
        %951 = sbr.rel (%p949) target = $region87
      $region86: #{_encode.3} parent=5 // pred_region
        %s952 = ssub.s32 %s22, 2
        // Predicated region
        $region88: #{_encode.3} parent=86 // pred_check
          %p953 = pneg %p329
        $region89: #{_encode.3} parent=86 // pred_check_branch
          %955 = sbr.rel (%p953) target = $region91
        $region90: #{_encode.3} parent=86 // pred_region
          %s956 = sand.u32 %s314, 1
          %s957 = scalar_lea.sflag [#allocation3], %s956
          %s958 = sand.u32 %s314, 1
          %s959 = smul.addr %s958, 8
          %s960 = scalar_lea.vmem [#allocation2], %s959
          %961 = dma.done %s957, 128
        $region91: #{_encode.3} parent=86 // pred_fallthru
          _
      $region87: #{_encode.3} parent=5 // pred_fallthru
        _
    $region6: #{_encode.3} parent=1 // loop_footer
      %s26 = sadd.s32 1, %s22
    $region7: #{_encode.3} parent=1 // loop_footer_branch
      %21 = sbr.rel target = $region3
    $region8: #{_encode.3} parent=1 // loop_exit
      _
    %962 = vsyncpa [#allocation3], 1
    %s963 = scalar_lea.sflag [#allocation3], 1
    %964 = vsyncpa %s963, 1

// kernel: _encode.2
$region0: #{_encode.2}
  #allocation0 [shape = 'u32[]', space=smem, size = 0x4, offset = 0x4, fixed_abs, tag = 'smem constant byte address 0x4 - core index']
  #allocation1 [shape = 'u32[144,128]{1,0:T(1,128)}', space=vmem, size = 0x12000, scoped, tag = 'internal scratch']
  %s0 = inlined_call_operand.vmem [shape: f32[2,8,32], index: 0, kind: input, shape index: {}]
  %s1 = inlined_call_operand.vmem [shape: bf16[4,32,24], index: 1, kind: input, shape index: {}]
  %s2 = inlined_call_operand.vmem [shape: f32[4,1,24], index: 2, kind: input, shape index: {}]
  %s3 = inlined_call_operand.vmem [shape: bf16[4,8,32], index: 3, kind: input, shape index: {}]
  %s4 = inlined_call_operand.vmem [shape: f32[1,32], index: 4, kind: input, shape index: {}]
  %s5 = inlined_call_operand.vmem [shape: f32[1,32], index: 5, kind: input, shape index: {}]
  %s6 = inlined_call_operand.vmem [shape: f32[1,32], index: 6, kind: input, shape index: {}]
  %s7 = inlined_call_operand.vmem [shape: bf16[32,64], index: 7, kind: input, shape index: {}]
  %s8 = inlined_call_operand.vmem [shape: f32[1,64], index: 8, kind: input, shape index: {}]
  %s9 = inlined_call_operand.vmem [shape: bf16[64,32], index: 9, kind: input, shape index: {}]
  %s10 = inlined_call_operand.vmem [shape: f32[1,32], index: 10, kind: input, shape index: {}]
  %s11 = inlined_call_operand.vmem [shape: f32[1,32], index: 11, kind: input, shape index: {}]
  %s12 = inlined_call_operand.vmem [shape: f32[1,32], index: 12, kind: input, shape index: {}]
  %s13 = inlined_call_operand.vmem [shape: f32[2,8,32], index: 13, kind: output, shape index: {}]
  %s14 = sld [smem:[#allocation0]]
  $region92: #{_encode.2} parent=0
    _
  %s16 = ssub.s32 1, %s14
  %s17 = scalar_select 0, %s16, %s14
  loop: start=0, step=1, limit=4
  $region2: #{_encode.2} parent=0 // loop_pre_header
    _
  $region3: #{_encode.2} parent=0 // loop_header
    %s19 = sphi 0, %s23
    %p20 = scmp.ge.s32.totalorder %s19, 4
    %s29 = sphi 0, %s31
    %s32 = sphi 0, %s29
    %s33 = sphi 0, %s32
    %s49 = sphi 0, %s33
    %s53 = sphi 0, %s53
    %s55 = sphi 0, %s53
    %s56 = sphi 0, %s55
    %s70 = sphi 0, %s56
    %s74 = sphi 0, %s74
    %s76 = sphi 0, %s74
    %s77 = sphi 0, %s76
    %s91 = sphi 0, %s77
    %s95 = sphi 0, %s95
    %s97 = sphi 0, %s95
    %s98 = sphi 0, %s97
    %s112 = sphi 0, %s98
    %s116 = sphi 0, %s116
    %s118 = sphi 0, %s116
    %s119 = sphi 0, %s118
    %s133 = sphi 0, %s119
    %s137 = sphi 0, %s137
    %s139 = sphi 0, %s137
    %s140 = sphi 0, %s139
    %s154 = sphi 0, %s140
    %s158 = sphi 0, %s158
    %s160 = sphi 0, %s158
    %s161 = sphi 0, %s160
    %s175 = sphi 0, %s161
    %s179 = sphi 0, %s179
    %s181 = sphi 0, %s179
    %s182 = sphi 0, %s181
    %s196 = sphi 0, %s182
    %s200 = sphi 0, %s200
    %s202 = sphi 0, %s200
    %s203 = sphi 0, %s202
    %s217 = sphi 0, %s203
    %s221 = sphi 0, %s221
    %s223 = sphi 0, %s221
    %s224 = sphi 0, %s223
    %s238 = sphi 0, %s224
    %s242 = sphi 0, %s242
    %s244 = sphi 0, %s242
    %s245 = sphi 0, %s244
    %s259 = sphi 0, %s245
    %s263 = sphi 0, %s263
    %s265 = sphi 0, %s263
    %s266 = sphi 0, %s265
    %s280 = sphi 0, %s266
    %s284 = sphi 0, %s284
    %s286 = sphi 0, %s284
    %s287 = sphi 0, %s286
    %s301 = sphi 0, %s287
    %s307 = sphi 0, %s309
    %s310 = sphi 0, %s307
    %s311 = sphi 0, %s310
    %s327 = sphi 0, %s311
  $region4: #{_encode.2} parent=0 // loop_header_branch
    %22 = sbr.rel (%p20) target = $region8
  $region5: #{_encode.2} parent=0 // loop_body
    %s24 = ssub.s32 %s19, 1
    %s25 = ssub.s32 %s19, 2
    %s26 = sadd.s32 %s19, 1
    %s27 = ssub.s32 %s19, %s26
    %p28 = scmp.eq.s32.totalorder %s27, 0
    %s30 = sadd.s32 %s29, 1
    %s31 = scalar_select %p28, %s29, %s30
    %p34 = pneg %p28
    %p35 = scmp.eq.s32.totalorder %s19, 1
    %p36 = por %p34, %p35
    %p37 = scmp.ne.s32.totalorder %s29, %s32
    %p38 = scmp.eq.s32.totalorder %s19, 0
    %p39 = por %p37, %p38
    %p40 = scmp.ne.s32.totalorder %s29, %s32
    %p41 = scmp.eq.s32.totalorder %s24, 1
    %p42 = por %p40, %p41
    %p43 = scmp.ne.s32.totalorder %s32, %s33
    %p44 = scmp.eq.s32.totalorder %s24, 0
    %p45 = por %p43, %p44
    %p46 = scmp.ne.s32.totalorder %s32, %s33
    %p47 = scmp.eq.s32.totalorder %s25, 1
    %p48 = por %p46, %p47
    %p50 = scmp.ne.s32.totalorder %s33, %s49
    %p51 = scmp.eq.s32.totalorder %s25, 0
    %p52 = por %p50, %p51
    %s54 = sadd.s32 %s53, 1
    %p57 = scmp.eq.s32.totalorder %s19, 1
    %p58 = scmp.ne.s32.totalorder %s53, %s55
    %p59 = scmp.eq.s32.totalorder %s19, 0
    %p60 = por %p58, %p59
    %p61 = scmp.ne.s32.totalorder %s53, %s55
    %p62 = scmp.eq.s32.totalorder %s24, 1
    %p63 = por %p61, %p62
    %p64 = scmp.ne.s32.totalorder %s55, %s56
    %p65 = scmp.eq.s32.totalorder %s24, 0
    %p66 = por %p64, %p65
    %p67 = scmp.ne.s32.totalorder %s55, %s56
    %p68 = scmp.eq.s32.totalorder %s25, 1
    %p69 = por %p67, %p68
    %p71 = scmp.ne.s32.totalorder %s56, %s70
    %p72 = scmp.eq.s32.totalorder %s25, 0
    %p73 = por %p71, %p72
    %s75 = sadd.s32 %s74, 1
    %p78 = scmp.eq.s32.totalorder %s19, 1
    %p79 = scmp.ne.s32.totalorder %s74, %s76
    %p80 = scmp.eq.s32.totalorder %s19, 0
    %p81 = por %p79, %p80
    %p82 = scmp.ne.s32.totalorder %s74, %s76
    %p83 = scmp.eq.s32.totalorder %s24, 1
    %p84 = por %p82, %p83
    %p85 = scmp.ne.s32.totalorder %s76, %s77
    %p86 = scmp.eq.s32.totalorder %s24, 0
    %p87 = por %p85, %p86
    %p88 = scmp.ne.s32.totalorder %s76, %s77
    %p89 = scmp.eq.s32.totalorder %s25, 1
    %p90 = por %p88, %p89
    %p92 = scmp.ne.s32.totalorder %s77, %s91
    %p93 = scmp.eq.s32.totalorder %s25, 0
    %p94 = por %p92, %p93
    %s96 = sadd.s32 %s95, 1
    %p99 = scmp.eq.s32.totalorder %s19, 1
    %p100 = scmp.ne.s32.totalorder %s95, %s97
    %p101 = scmp.eq.s32.totalorder %s19, 0
    %p102 = por %p100, %p101
    %p103 = scmp.ne.s32.totalorder %s95, %s97
    %p104 = scmp.eq.s32.totalorder %s24, 1
    %p105 = por %p103, %p104
    %p106 = scmp.ne.s32.totalorder %s97, %s98
    %p107 = scmp.eq.s32.totalorder %s24, 0
    %p108 = por %p106, %p107
    %p109 = scmp.ne.s32.totalorder %s97, %s98
    %p110 = scmp.eq.s32.totalorder %s25, 1
    %p111 = por %p109, %p110
    %p113 = scmp.ne.s32.totalorder %s98, %s112
    %p114 = scmp.eq.s32.totalorder %s25, 0
    %p115 = por %p113, %p114
    %s117 = sadd.s32 %s116, 1
    %p120 = scmp.eq.s32.totalorder %s19, 1
    %p121 = scmp.ne.s32.totalorder %s116, %s118
    %p122 = scmp.eq.s32.totalorder %s19, 0
    %p123 = por %p121, %p122
    %p124 = scmp.ne.s32.totalorder %s116, %s118
    %p125 = scmp.eq.s32.totalorder %s24, 1
    %p126 = por %p124, %p125
    %p127 = scmp.ne.s32.totalorder %s118, %s119
    %p128 = scmp.eq.s32.totalorder %s24, 0
    %p129 = por %p127, %p128
    %p130 = scmp.ne.s32.totalorder %s118, %s119
    %p131 = scmp.eq.s32.totalorder %s25, 1
    %p132 = por %p130, %p131
    %p134 = scmp.ne.s32.totalorder %s119, %s133
    %p135 = scmp.eq.s32.totalorder %s25, 0
    %p136 = por %p134, %p135
    %s138 = sadd.s32 %s137, 1
    %p141 = scmp.eq.s32.totalorder %s19, 1
    %p142 = scmp.ne.s32.totalorder %s137, %s139
    %p143 = scmp.eq.s32.totalorder %s19, 0
    %p144 = por %p142, %p143
    %p145 = scmp.ne.s32.totalorder %s137, %s139
    %p146 = scmp.eq.s32.totalorder %s24, 1
    %p147 = por %p145, %p146
    %p148 = scmp.ne.s32.totalorder %s139, %s140
    %p149 = scmp.eq.s32.totalorder %s24, 0
    %p150 = por %p148, %p149
    %p151 = scmp.ne.s32.totalorder %s139, %s140
    %p152 = scmp.eq.s32.totalorder %s25, 1
    %p153 = por %p151, %p152
    %p155 = scmp.ne.s32.totalorder %s140, %s154
    %p156 = scmp.eq.s32.totalorder %s25, 0
    %p157 = por %p155, %p156
    %s159 = sadd.s32 %s158, 1
    %p162 = scmp.eq.s32.totalorder %s19, 1
    %p163 = scmp.ne.s32.totalorder %s158, %s160
    %p164 = scmp.eq.s32.totalorder %s19, 0
    %p165 = por %p163, %p164
    %p166 = scmp.ne.s32.totalorder %s158, %s160
    %p167 = scmp.eq.s32.totalorder %s24, 1
    %p168 = por %p166, %p167
    %p169 = scmp.ne.s32.totalorder %s160, %s161
    %p170 = scmp.eq.s32.totalorder %s24, 0
    %p171 = por %p169, %p170
    %p172 = scmp.ne.s32.totalorder %s160, %s161
    %p173 = scmp.eq.s32.totalorder %s25, 1
    %p174 = por %p172, %p173
    %p176 = scmp.ne.s32.totalorder %s161, %s175
    %p177 = scmp.eq.s32.totalorder %s25, 0
    %p178 = por %p176, %p177
    %s180 = sadd.s32 %s179, 1
    %p183 = scmp.eq.s32.totalorder %s19, 1
    %p184 = scmp.ne.s32.totalorder %s179, %s181
    %p185 = scmp.eq.s32.totalorder %s19, 0
    %p186 = por %p184, %p185
    %p187 = scmp.ne.s32.totalorder %s179, %s181
    %p188 = scmp.eq.s32.totalorder %s24, 1
    %p189 = por %p187, %p188
    %p190 = scmp.ne.s32.totalorder %s181, %s182
    %p191 = scmp.eq.s32.totalorder %s24, 0
    %p192 = por %p190, %p191
    %p193 = scmp.ne.s32.totalorder %s181, %s182
    %p194 = scmp.eq.s32.totalorder %s25, 1
    %p195 = por %p193, %p194
    %p197 = scmp.ne.s32.totalorder %s182, %s196
    %p198 = scmp.eq.s32.totalorder %s25, 0
    %p199 = por %p197, %p198
    %s201 = sadd.s32 %s200, 1
    %p204 = scmp.eq.s32.totalorder %s19, 1
    %p205 = scmp.ne.s32.totalorder %s200, %s202
    %p206 = scmp.eq.s32.totalorder %s19, 0
    %p207 = por %p205, %p206
    %p208 = scmp.ne.s32.totalorder %s200, %s202
    %p209 = scmp.eq.s32.totalorder %s24, 1
    %p210 = por %p208, %p209
    %p211 = scmp.ne.s32.totalorder %s202, %s203
    %p212 = scmp.eq.s32.totalorder %s24, 0
    %p213 = por %p211, %p212
    %p214 = scmp.ne.s32.totalorder %s202, %s203
    %p215 = scmp.eq.s32.totalorder %s25, 1
    %p216 = por %p214, %p215
    %p218 = scmp.ne.s32.totalorder %s203, %s217
    %p219 = scmp.eq.s32.totalorder %s25, 0
    %p220 = por %p218, %p219
    %s222 = sadd.s32 %s221, 1
    %p225 = scmp.eq.s32.totalorder %s19, 1
    %p226 = scmp.ne.s32.totalorder %s221, %s223
    %p227 = scmp.eq.s32.totalorder %s19, 0
    %p228 = por %p226, %p227
    %p229 = scmp.ne.s32.totalorder %s221, %s223
    %p230 = scmp.eq.s32.totalorder %s24, 1
    %p231 = por %p229, %p230
    %p232 = scmp.ne.s32.totalorder %s223, %s224
    %p233 = scmp.eq.s32.totalorder %s24, 0
    %p234 = por %p232, %p233
    %p235 = scmp.ne.s32.totalorder %s223, %s224
    %p236 = scmp.eq.s32.totalorder %s25, 1
    %p237 = por %p235, %p236
    %p239 = scmp.ne.s32.totalorder %s224, %s238
    %p240 = scmp.eq.s32.totalorder %s25, 0
    %p241 = por %p239, %p240
    %s243 = sadd.s32 %s242, 1
    %p246 = scmp.eq.s32.totalorder %s19, 1
    %p247 = scmp.ne.s32.totalorder %s242, %s244
    %p248 = scmp.eq.s32.totalorder %s19, 0
    %p249 = por %p247, %p248
    %p250 = scmp.ne.s32.totalorder %s242, %s244
    %p251 = scmp.eq.s32.totalorder %s24, 1
    %p252 = por %p250, %p251
    %p253 = scmp.ne.s32.totalorder %s244, %s245
    %p254 = scmp.eq.s32.totalorder %s24, 0
    %p255 = por %p253, %p254
    %p256 = scmp.ne.s32.totalorder %s244, %s245
    %p257 = scmp.eq.s32.totalorder %s25, 1
    %p258 = por %p256, %p257
    %p260 = scmp.ne.s32.totalorder %s245, %s259
    %p261 = scmp.eq.s32.totalorder %s25, 0
    %p262 = por %p260, %p261
    %s264 = sadd.s32 %s263, 1
    %p267 = scmp.eq.s32.totalorder %s19, 1
    %p268 = scmp.ne.s32.totalorder %s263, %s265
    %p269 = scmp.eq.s32.totalorder %s19, 0
    %p270 = por %p268, %p269
    %p271 = scmp.ne.s32.totalorder %s263, %s265
    %p272 = scmp.eq.s32.totalorder %s24, 1
    %p273 = por %p271, %p272
    %p274 = scmp.ne.s32.totalorder %s265, %s266
    %p275 = scmp.eq.s32.totalorder %s24, 0
    %p276 = por %p274, %p275
    %p277 = scmp.ne.s32.totalorder %s265, %s266
    %p278 = scmp.eq.s32.totalorder %s25, 1
    %p279 = por %p277, %p278
    %p281 = scmp.ne.s32.totalorder %s266, %s280
    %p282 = scmp.eq.s32.totalorder %s25, 0
    %p283 = por %p281, %p282
    %s285 = sadd.s32 %s284, 1
    %p288 = scmp.eq.s32.totalorder %s19, 1
    %p289 = scmp.ne.s32.totalorder %s284, %s286
    %p290 = scmp.eq.s32.totalorder %s19, 0
    %p291 = por %p289, %p290
    %p292 = scmp.ne.s32.totalorder %s284, %s286
    %p293 = scmp.eq.s32.totalorder %s24, 1
    %p294 = por %p292, %p293
    %p295 = scmp.ne.s32.totalorder %s286, %s287
    %p296 = scmp.eq.s32.totalorder %s24, 0
    %p297 = por %p295, %p296
    %p298 = scmp.ne.s32.totalorder %s286, %s287
    %p299 = scmp.eq.s32.totalorder %s25, 1
    %p300 = por %p298, %p299
    %p302 = scmp.ne.s32.totalorder %s287, %s301
    %p303 = scmp.eq.s32.totalorder %s25, 0
    %p304 = por %p302, %p303
    %s305 = ssub.s32 %s19, %s26
    %p306 = scmp.eq.s32.totalorder %s305, 0
    %s308 = sadd.s32 %s307, 1
    %s309 = scalar_select %p306, %s307, %s308
    %p312 = pneg %p306
    %p313 = scmp.eq.s32.totalorder %s19, 1
    %p314 = por %p312, %p313
    %p315 = scmp.ne.s32.totalorder %s307, %s310
    %p316 = scmp.eq.s32.totalorder %s19, 0
    %p317 = por %p315, %p316
    %p318 = scmp.ne.s32.totalorder %s307, %s310
    %p319 = scmp.eq.s32.totalorder %s24, 1
    %p320 = por %p318, %p319
    %p321 = scmp.ne.s32.totalorder %s310, %s311
    %p322 = scmp.eq.s32.totalorder %s24, 0
    %p323 = por %p321, %p322
    %p324 = scmp.ne.s32.totalorder %s310, %s311
    %p325 = scmp.eq.s32.totalorder %s25, 1
    %p326 = por %p324, %p325
    %p328 = scmp.ne.s32.totalorder %s311, %s327
    %p329 = scmp.eq.s32.totalorder %s25, 0
    %p330 = por %p328, %p329
    %p331 = scmp.le.s32.totalorder 1, %s19
    %p332 = scmp.lt.s32.totalorder %s19, 3
    %p333 = pnand %p331, %p332
    %p334 = pneg %p333
    // Predicated region
    $region9: #{_encode.2} parent=5 // pred_check
      _
    $region10: #{_encode.2} parent=5 // pred_check_branch
      %336 = sbr.rel (%p333) target = $region12
    $region11: #{_encode.2} parent=5 // pred_region
      %s337 = ssub.s32 %s19, 1
      // Predicated region
      $region13: #{_encode.2} parent=11 // pred_check
        %p338 = pneg %p66
      $region14: #{_encode.2} parent=11 // pred_check_branch
        %340 = sbr.rel (%p338) target = $region16
      $region15: #{_encode.2} parent=11 // pred_region
        _
      $region16: #{_encode.2} parent=11 // pred_fallthru
        _
      // Predicated region
      $region17: #{_encode.2} parent=11 // pred_check
        %p341 = pneg %p87
      $region18: #{_encode.2} parent=11 // pred_check_branch
        %343 = sbr.rel (%p341) target = $region20
      $region19: #{_encode.2} parent=11 // pred_region
        _
      $region20: #{_encode.2} parent=11 // pred_fallthru
        _
      // Predicated region
      $region21: #{_encode.2} parent=11 // pred_check
        %p344 = pneg %p108
      $region22: #{_encode.2} parent=11 // pred_check_branch
        %346 = sbr.rel (%p344) target = $region24
      $region23: #{_encode.2} parent=11 // pred_region
        _
      $region24: #{_encode.2} parent=11 // pred_fallthru
        _
      // Predicated region
      $region25: #{_encode.2} parent=11 // pred_check
        %p347 = pneg %p129
      $region26: #{_encode.2} parent=11 // pred_check_branch
        %349 = sbr.rel (%p347) target = $region28
      $region27: #{_encode.2} parent=11 // pred_region
        _
      $region28: #{_encode.2} parent=11 // pred_fallthru
        _
      // Predicated region
      $region29: #{_encode.2} parent=11 // pred_check
        %p350 = pneg %p150
      $region30: #{_encode.2} parent=11 // pred_check_branch
        %352 = sbr.rel (%p350) target = $region32
      $region31: #{_encode.2} parent=11 // pred_region
        _
      $region32: #{_encode.2} parent=11 // pred_fallthru
        _
      // Predicated region
      $region33: #{_encode.2} parent=11 // pred_check
        %p353 = pneg %p171
      $region34: #{_encode.2} parent=11 // pred_check_branch
        %355 = sbr.rel (%p353) target = $region36
      $region35: #{_encode.2} parent=11 // pred_region
        _
      $region36: #{_encode.2} parent=11 // pred_fallthru
        _
      // Predicated region
      $region37: #{_encode.2} parent=11 // pred_check
        %p356 = pneg %p192
      $region38: #{_encode.2} parent=11 // pred_check_branch
        %358 = sbr.rel (%p356) target = $region40
      $region39: #{_encode.2} parent=11 // pred_region
        _
      $region40: #{_encode.2} parent=11 // pred_fallthru
        _
      // Predicated region
      $region41: #{_encode.2} parent=11 // pred_check
        %p359 = pneg %p213
      $region42: #{_encode.2} parent=11 // pred_check_branch
        %361 = sbr.rel (%p359) target = $region44
      $region43: #{_encode.2} parent=11 // pred_region
        _
      $region44: #{_encode.2} parent=11 // pred_fallthru
        _
      // Predicated region
      $region45: #{_encode.2} parent=11 // pred_check
        %p362 = pneg %p234
      $region46: #{_encode.2} parent=11 // pred_check_branch
        %364 = sbr.rel (%p362) target = $region48
      $region47: #{_encode.2} parent=11 // pred_region
        _
      $region48: #{_encode.2} parent=11 // pred_fallthru
        _
      // Predicated region
      $region49: #{_encode.2} parent=11 // pred_check
        %p365 = pneg %p255
      $region50: #{_encode.2} parent=11 // pred_check_branch
        %367 = sbr.rel (%p365) target = $region52
      $region51: #{_encode.2} parent=11 // pred_region
        _
      $region52: #{_encode.2} parent=11 // pred_fallthru
        _
      // Predicated region
      $region53: #{_encode.2} parent=11 // pred_check
        %p368 = pneg %p276
      $region54: #{_encode.2} parent=11 // pred_check_branch
        %370 = sbr.rel (%p368) target = $region56
      $region55: #{_encode.2} parent=11 // pred_region
        _
      $region56: #{_encode.2} parent=11 // pred_fallthru
        _
      // Predicated region
      $region57: #{_encode.2} parent=11 // pred_check
        %p371 = pneg %p297
      $region58: #{_encode.2} parent=11 // pred_check_branch
        %373 = sbr.rel (%p371) target = $region60
      $region59: #{_encode.2} parent=11 // pred_region
        _
      $region60: #{_encode.2} parent=11 // pred_fallthru
        _
    $region12: #{_encode.2} parent=5 // pred_fallthru
      _
    %p374 = scmp.lt.s32.totalorder %s19, 2
    // Predicated region
    $region61: #{_encode.2} parent=5 // pred_check
      %p375 = pneg %p374
    $region62: #{_encode.2} parent=5 // pred_check_branch
      %377 = sbr.rel (%p375) target = $region64
    $region63: #{_encode.2} parent=5 // pred_region
      // Predicated region
      $region65: #{_encode.2} parent=63 // pred_check
        %p378 = pneg %p39
      $region66: #{_encode.2} parent=63 // pred_check_branch
        %380 = sbr.rel (%p378) target = $region68
      $region67: #{_encode.2} parent=63 // pred_region
        %p381 = scmp.lt.s32.totalorder %s19, 1
        %s382 = scalar_select %p381, %s19, 1
        %s383 = smul.addr %s382, 8
        %s384 = scalar_lea.vmem %s0, %s383
      $region68: #{_encode.2} parent=63 // pred_fallthru
        _
    $region64: #{_encode.2} parent=5 // pred_fallthru
      _
    %p385 = scmp.le.s32.totalorder 1, %s19
    %p386 = scmp.lt.s32.totalorder %s19, 3
    %p387 = pnand %p385, %p386
    %p388 = pneg %p387
    // Predicated region
    $region69: #{_encode.2} parent=5 // pred_check
      _
    $region70: #{_encode.2} parent=5 // pred_check_branch
      %390 = sbr.rel (%p387) target = $region72
    $region71: #{_encode.2} parent=5 // pred_region
      %s391 = ssub.s32 %s19, 1
      %p392 = scmp.lt.s32.totalorder %s24, 1
      %s393 = scalar_select %p392, %s24, 1
      %s394 = smul.addr %s393, 8
      %s395 = scalar_lea.vmem %s0, %s394
      %p396 = pneg %p45
      %p397 = pneg %p42
      %p398 = pneg %p66
      %p399 = pneg %p63
      %p400 = pneg %p87
      %p401 = pneg %p84
      %p402 = pneg %p108
      %p403 = pneg %p105
      %p404 = pneg %p129
      %p405 = pneg %p126
      %p406 = pneg %p150
      %p407 = pneg %p147
      %p408 = pneg %p171
      %p409 = pneg %p168
      %p410 = pneg %p192
      %p411 = pneg %p189
      %p412 = pneg %p213
      %p413 = pneg %p210
      %p414 = pneg %p234
      %p415 = pneg %p231
      %p416 = pneg %p255
      %p417 = pneg %p252
      %p418 = pneg %p276
      %p419 = pneg %p273
      %p420 = pneg %p297
      %p421 = pneg %p294
      %p422 = pneg %p323
      %p423 = pneg %p320
      %p424 = scmp.lt.s32.totalorder %s24, 1
      %s425 = scalar_select %p424, %s24, 1
      %s426 = smul.addr %s425, 8
      %s427 = scalar_lea.vmem %s13, %s426
      %p428 = scmp.lt.s32.totalorder %s24, 1
      %s429 = scalar_select %p428, %s24, 1
      %s430 = smul.addr %s429, 8
      %s431 = scalar_lea.vmem %s0, %s430
      %p432 = scmp.lt.s32.totalorder %s24, 1
      %s433 = scalar_select %p432, %s24, 1
      %s434 = smul.addr %s433, 8
      %s435 = scalar_lea.vmem %s13, %s434
      %v437 = vld [vmem:[%s431] sm:$0xff]
      %v438 = vpack.c.bf16 %v437, %v437
      %v439 = vlaneseq
      %v440 = vshrl.u32 %v439, 7
      %v441 = vlaneseq
      %v442 = vand.u32 %v441, 127
      %vm443 = vcmp.le.s32.totalorder %v442, %v440
      %v444 = vsel %vm443, 0.0, -10000.0
      loop: start=0, step=1, limit=4
      $region73: #{_encode.2} parent=71 // loop_pre_header
        _
      $region74: #{_encode.2} parent=71 // loop_header
        %s446 = sphi 0, %s450
        %p447 = scmp.ge.s32.totalorder %s446, 4
        %v451 = vphi 0.0, %v685
      $region75: #{_encode.2} parent=71 // loop_header_branch
        %449 = sbr.rel (%p447) target = $region79
      $region76: #{_encode.2} parent=71 // loop_body
        %s452 = smul.u32 %s446, 4
        %s453 = smul.addr %s452, 4
        %s454 = scalar_lea.vmem %s1, %s453
        %v455 = vld [vmem:[%s454] sm:$0xf]
        %v456 = vld [vmem:[%s454 + $0x4] sm:$0xf]
        %v457 = vld [vmem:[%s454 + $0x8] sm:$0xf]
        %v458 = vld [vmem:[%s454 + $0xc] sm:$0xf]
        %s459 = scalar_lea.vmem %s2, %s446
        %v460 = vld [vmem:[%s459] sm:$0x1]
        %v462 = vlaneseq
        %v463 = vshrl.u32 %v462, 7
        %v464 = vsub.s32 0, %v463
        %v465 = vrot.slane %v460, %v464
        %v471 = vunpack.c.l.b16 %v455
        %v472 = vunpack.c.l.b16 %v456
        %v473 = vunpack.c.l.b16 %v457
        %v474 = vunpack.c.l.b16 %v458
        %v475 = vpack.c.b16 %v472, %v471
        %v476 = vpack.c.b16 %v474, %v473
        %vm479 = vcmask 261120
        %v481 = vsel %vm479, %v438, 0
        %483 = vmatprep.subr.bf16.mxu0 0
        %484 = vmatpush1.bf16.msra.mxu0 %v475
        %485 = vmatprep.subr.bf16.mxu0 0
        %486 = vmatpush1.bf16.msra.mxu0 %v476
        %487 = vmatprep.subr.bf16.mxu0 0
        %488 = vmatpush1.bf16.msra.mxu0 0
        %489 = vmatprep.subr.bf16.mxu0 0
        %490 = vmatpush1.bf16.msra.mxu0 0
        %491 = vmatprep.subr.bf16.mxu0 0
        %492 = vmatpush1.bf16.msra.mxu0 0
        %493 = vmatprep.subr.bf16.mxu0 0
        %494 = vmatpush1.bf16.msra.mxu0 0
        %495 = vmatprep.subr.bf16.mxu0 0
        %496 = vmatpush1.bf16.msra.mxu0 0
        %497 = vmatprep.subr.bf16.mxu0 0
        %498 = vmatpush1.bf16.msra.mxu0 0
        %499 = vmatprep.subr.bf16.mxu0 0
        %500 = vmatpush1.bf16.msra.mxu0 0
        %501 = vmatprep.subr.bf16.mxu0 0
        %502 = vmatpush1.bf16.msra.mxu0 0
        %503 = vmatprep.subr.bf16.mxu0 0
        %504 = vmatpush1.bf16.msra.mxu0 0
        %505 = vmatprep.subr.bf16.mxu0 0
        %506 = vmatpush1.bf16.msra.mxu0 0
        %507 = vmatprep.subr.bf16.mxu0 0
        %508 = vmatpush1.bf16.msra.mxu0 0
        %509 = vmatprep.subr.bf16.mxu0 0
        %510 = vmatpush1.bf16.msra.mxu0 0
        %511 = vmatprep.subr.bf16.mxu0 0
        %512 = vmatpush1.bf16.msra.mxu0 0
        %513 = vmatprep.subr.bf16.mxu0 0
        %514 = vmatpush1.bf16.msra.mxu0 0
        %515 = vmatprep.mubr.bf16.mxu0 0
        %516 = vmatmul.mubr.bf16.gmra.mrb[0].mxu0 %v481
        %v517 = vpop.f32.mrb[0].mxu0
        %v518 = vadd.f32 %v465, %v517
        %v519 = vpop.f32.mrb[0].mxu0
        %v520 = vpop.f32.mrb[0].mxu0
        %v521 = vpop.f32.mrb[0].mxu0
        %522 = vdwg.mxu0
        %v523 = vpack.c.bf16 %v518, %v518
        %525 = vrot.lane.b32.xlu0 %v523, 120
        %v526 = vpop.permute.xlu0 %525
        %vm527 = vcmask 64512
        %v529 = vsel %vm527, %v523, 0
        %v532 = vsel %vm527, %v526, 0
        %534 = vmatprep.subr.bf16.mxu0 0
        %535 = vmatpush1.bf16.xpose.msra.mxu0 %v532
        %536 = vmatprep.subr.bf16.mxu0 0
        %537 = vmatpush1.bf16.xpose.msra.mxu0 0
        %538 = vmatprep.subr.bf16.mxu0 0
        %539 = vmatpush1.bf16.xpose.msra.mxu0 0
        %540 = vmatprep.subr.bf16.mxu0 0
        %541 = vmatpush1.bf16.xpose.msra.mxu0 0
        %542 = vmatprep.subr.bf16.mxu0 0
        %543 = vmatpush1.bf16.xpose.msra.mxu0 0
        %544 = vmatprep.subr.bf16.mxu0 0
        %545 = vmatpush1.bf16.xpose.msra.mxu0 0
        %546 = vmatprep.subr.bf16.mxu0 0
        %547 = vmatpush1.bf16.xpose.msra.mxu0 0
        %548 = vmatprep.subr.bf16.mxu0 0
        %549 = vmatpush1.bf16.xpose.msra.mxu0 0
        %550 = vmatprep.subr.bf16.mxu0 0
        %551 = vmatpush1.bf16.xpose.msra.mxu0 0
        %552 = vmatprep.subr.bf16.mxu0 0
        %553 = vmatpush1.bf16.xpose.msra.mxu0 0
        %554 = vmatprep.subr.bf16.mxu0 0
        %555 = vmatpush1.bf16.xpose.msra.mxu0 0
        %556 = vmatprep.subr.bf16.mxu0 0
        %557 = vmatpush1.bf16.xpose.msra.mxu0 0
        %558 = vmatprep.subr.bf16.mxu0 0
        %559 = vmatpush1.bf16.xpose.msra.mxu0 0
        %560 = vmatprep.subr.bf16.mxu0 0
        %561 = vmatpush1.bf16.xpose.msra.mxu0 0
        %562 = vmatprep.subr.bf16.mxu0 0
        %563 = vmatpush1.bf16.xpose.msra.mxu0 0
        %564 = vmatprep.subr.bf16.mxu0 0
        %565 = vmatpush1.bf16.xpose.msra.mxu0 0
        %566 = vmatprep.mubr.bf16.mxu0 0
        %567 = vmatmul.mubr.bf16.gmra.mrb[0].mxu0 %v529
        %v568 = vpop.f32.mrb[0].mxu0
        %v569 = vadd.f32 %v444, %v568
        %v570 = vpop.f32.mrb[0].mxu0
        %v571 = vpop.f32.mrb[0].mxu0
        %v572 = vpop.f32.mrb[0].mxu0
        %573 = vdwg.mxu0
        %v574 = vsel %vm527, %v569, -inf
        %575 = vmax.xlane.f32.xlu0 %v574
        %v576 = vpop.xlane.xlu0 %575
        %v577 = vsub.f32 %v569, %v576
        %v578 = vmul.f32 %v577, 1.442695
        %v579 = vpow.pop %v578
        %v580 = vsel %vm527, %v579, 0.0
        %581 = vadd.xlane.f32.xlu0 %v580
        %v582 = vpop.xlane.xlu0 %581
        %v583 = vrcp.pop %v582
        %v584 = vmul.f32 %v579, %v583
        %v585 = vpack.c.bf16 %v584, %v584
        %586 = vrot.lane.b32.xlu0 %v523, 112
        %v587 = vpop.permute.xlu0 %586
        %v589 = vsel %vm527, %v585, 0
        %vm591 = vcmask 1043456
        %v593 = vsel %vm591, %v587, 0
        %595 = vmatprep.subr.bf16.mxu0 0
        %596 = vmatpush1.bf16.msra.mxu0 %v593
        %597 = vmatprep.subr.bf16.mxu0 0
        %598 = vmatpush1.bf16.msra.mxu0 0
        %599 = vmatprep.subr.bf16.mxu0 0
        %600 = vmatpush1.bf16.msra.mxu0 0
        %601 = vmatprep.subr.bf16.mxu0 0
        %602 = vmatpush1.bf16.msra.mxu0 0
        %603 = vmatprep.subr.bf16.mxu0 0
        %604 = vmatpush1.bf16.msra.mxu0 0
        %605 = vmatprep.subr.bf16.mxu0 0
        %606 = vmatpush1.bf16.msra.mxu0 0
        %607 = vmatprep.subr.bf16.mxu0 0
        %608 = vmatpush1.bf16.msra.mxu0 0
        %609 = vmatprep.subr.bf16.mxu0 0
        %610 = vmatpush1.bf16.msra.mxu0 0
        %611 = vmatprep.subr.bf16.mxu0 0
        %612 = vmatpush1.bf16.msra.mxu0 0
        %613 = vmatprep.subr.bf16.mxu0 0
        %614 = vmatpush1.bf16.msra.mxu0 0
        %615 = vmatprep.subr.bf16.mxu0 0
        %616 = vmatpush1.bf16.msra.mxu0 0
        %617 = vmatprep.subr.bf16.mxu0 0
        %618 = vmatpush1.bf16.msra.mxu0 0
        %619 = vmatprep.subr.bf16.mxu0 0
        %620 = vmatpush1.bf16.msra.mxu0 0
        %621 = vmatprep.subr.bf16.mxu0 0
        %622 = vmatpush1.bf16.msra.mxu0 0
        %623 = vmatprep.subr.bf16.mxu0 0
        %624 = vmatpush1.bf16.msra.mxu0 0
        %625 = vmatprep.subr.bf16.mxu0 0
        %626 = vmatpush1.bf16.msra.mxu0 0
        %627 = vmatprep.mubr.bf16.mxu0 0
        %628 = vmatmul.mubr.bf16.gmra.mrb[0].mxu0 %v589
        %v629 = vpop.f32.mrb[0].mxu0
        %v630 = vadd.f32 0.0, %v629
        %v631 = vpop.f32.mrb[0].mxu0
        %v632 = vpop.f32.mrb[0].mxu0
        %v633 = vpop.f32.mrb[0].mxu0
        %634 = vdwg.mxu0
        %v635 = vpack.c.bf16 %v630, %v630
        %s636 = smul.addr %s446, 4
        %s637 = scalar_lea.vmem %s3, %s636
        %v638 = vld [vmem:[%s637] sm:$0xf]
        %v640 = vsel %vm527, %v635, 0
        %v643 = vsel %vm591, %v638, 0
        %645 = vmatprep.subr.bf16.mxu0 0
        %646 = vmatpush1.bf16.msra.mxu0 %v643
        %647 = vmatprep.subr.bf16.mxu0 0
        %648 = vmatpush1.bf16.msra.mxu0 0
        %649 = vmatprep.subr.bf16.mxu0 0
        %650 = vmatpush1.bf16.msra.mxu0 0
        %651 = vmatprep.subr.bf16.mxu0 0
        %652 = vmatpush1.bf16.msra.mxu0 0
        %653 = vmatprep.subr.bf16.mxu0 0
        %654 = vmatpush1.bf16.msra.mxu0 0
        %655 = vmatprep.subr.bf16.mxu0 0
        %656 = vmatpush1.bf16.msra.mxu0 0
        %657 = vmatprep.subr.bf16.mxu0 0
        %658 = vmatpush1.bf16.msra.mxu0 0
        %659 = vmatprep.subr.bf16.mxu0 0
        %660 = vmatpush1.bf16.msra.mxu0 0
        %661 = vmatprep.subr.bf16.mxu0 0
        %662 = vmatpush1.bf16.msra.mxu0 0
        %663 = vmatprep.subr.bf16.mxu0 0
        %664 = vmatpush1.bf16.msra.mxu0 0
        %665 = vmatprep.subr.bf16.mxu0 0
        %666 = vmatpush1.bf16.msra.mxu0 0
        %667 = vmatprep.subr.bf16.mxu0 0
        %668 = vmatpush1.bf16.msra.mxu0 0
        %669 = vmatprep.subr.bf16.mxu0 0
        %670 = vmatpush1.bf16.msra.mxu0 0
        %671 = vmatprep.subr.bf16.mxu0 0
        %672 = vmatpush1.bf16.msra.mxu0 0
        %673 = vmatprep.subr.bf16.mxu0 0
        %674 = vmatpush1.bf16.msra.mxu0 0
        %675 = vmatprep.subr.bf16.mxu0 0
        %676 = vmatpush1.bf16.msra.mxu0 0
        %677 = vmatprep.mubr.bf16.mxu0 0
        %678 = vmatmul.mubr.bf16.gmra.mrb[0].mxu0 %v640
        %v679 = vpop.f32.mrb[0].mxu0
        %v680 = vadd.f32 0.0, %v679
        %v681 = vpop.f32.mrb[0].mxu0
        %v682 = vpop.f32.mrb[0].mxu0
        %v683 = vpop.f32.mrb[0].mxu0
        %684 = vdwg.mxu0
        %v685 = vadd.f32 %v451, %v680
      $region77: #{_encode.2} parent=71 // loop_footer
        %s450 = sadd.s32 1, %s446
      $region78: #{_encode.2} parent=71 // loop_footer_branch
        %445 = sbr.rel target = $region74
      $region79: #{_encode.2} parent=71 // loop_exit
        _
      %v686 = vld [vmem:[%s4] sm:$0x1]
      %v688 = vlaneseq
      %v689 = vshrl.u32 %v688, 7
      %v690 = vsub.s32 0, %v689
      %v691 = vrot.slane %v686, %v690
      %v693 = vadd.f32 %v451, %v691
      %v694 = vadd.f32 %v693, %v437
      %v695 = vld [vmem:[%s5] sm:$0x1]
      %v696 = vld [vmem:[%s6] sm:$0x1]
      %vm697 = vcmask 261120
      %v698 = vsel %vm697, %v694, 0.0
      %699 = vadd.xlane.f32.xlu0 %v698
      %v700 = vpop.xlane.xlu0 %699
      %v701 = vrcp.pop 32.0
      %v702 = vmul.f32 %v700, %v701
      %v703 = vsub.f32 %v694, %v702
      %v704 = vmul.f32 %v703, %v703
      %v705 = vsel %vm697, %v704, 0.0
      %706 = vadd.xlane.f32.xlu0 %v705
      %v707 = vpop.xlane.xlu0 %706
      %v708 = vrcp.pop 31.0
      %v709 = vmul.f32 %v707, %v708
      %v710 = vrsqrt.pop %v709
      %v711 = vmul.f32 %v709, %v710
      %vm712 = vcmp.eq.f32.partialorder %v709, inf
      %v713 = vsel %vm712, %v709, %v711
      %vm714 = vcmp.eq.f32.partialorder %v709, 0.0
      %v715 = vand.u32 %v709, 2147483648
      %v716 = vsel %vm714, %v715, %v713
      %v717 = vadd.f32 %v716, 1e-06
      %v718 = vrcp.pop %v717
      %v719 = vmul.f32 1.0, %v718
      %v721 = vlaneseq
      %v722 = vshrl.u32 %v721, 7
      %v723 = vsub.s32 0, %v722
      %v724 = vrot.slane %v695, %v723
      %v726 = vmul.f32 %v724, %v703
      %v727 = vmul.f32 %v726, %v719
      %v729 = vlaneseq
      %v730 = vshrl.u32 %v729, 7
      %v731 = vsub.s32 0, %v730
      %v732 = vrot.slane %v696, %v731
      %v734 = vadd.f32 %v727, %v732
      %v735 = vpack.c.bf16 %v734, %v734
      %v736 = vld [vmem:[%s7] sm:$0xf]
      %v737 = vld [vmem:[%s7 + $0x4] sm:$0xf]
      %v738 = vld [vmem:[%s7 + $0x8] sm:$0xf]
      %v739 = vld [vmem:[%s7 + $0xc] sm:$0xf]
      %v740 = vld [vmem:[%s8] sm:$0x1]
      %v742 = vlaneseq
      %v743 = vshrl.u32 %v742, 7
      %v744 = vsub.s32 0, %v743
      %v745 = vrot.slane %v740, %v744
      %v751 = vunpack.c.l.b16 %v736
      %v752 = vunpack.c.l.b16 %v737
      %v753 = vunpack.c.l.b16 %v738
      %v754 = vunpack.c.l.b16 %v739
      %v755 = vpack.c.b16 %v752, %v751
      %v756 = vpack.c.b16 %v754, %v753
      %v760 = vsel %vm697, %v735, 0
      %762 = vmatprep.subr.bf16.mxu0 0
      %763 = vmatpush1.bf16.msra.mxu0 %v755
      %764 = vmatprep.subr.bf16.mxu0 0
      %765 = vmatpush1.bf16.msra.mxu0 %v756
      %766 = vmatprep.subr.bf16.mxu0 0
      %767 = vmatpush1.bf16.msra.mxu0 0
      %768 = vmatprep.subr.bf16.mxu0 0
      %769 = vmatpush1.bf16.msra.mxu0 0
      %770 = vmatprep.subr.bf16.mxu0 0
      %771 = vmatpush1.bf16.msra.mxu0 0
      %772 = vmatprep.subr.bf16.mxu0 0
      %773 = vmatpush1.bf16.msra.mxu0 0
      %774 = vmatprep.subr.bf16.mxu0 0
      %775 = vmatpush1.bf16.msra.mxu0 0
      %776 = vmatprep.subr.bf16.mxu0 0
      %777 = vmatpush1.bf16.msra.mxu0 0
      %778 = vmatprep.subr.bf16.mxu0 0
      %779 = vmatpush1.bf16.msra.mxu0 0
      %780 = vmatprep.subr.bf16.mxu0 0
      %781 = vmatpush1.bf16.msra.mxu0 0
      %782 = vmatprep.subr.bf16.mxu0 0
      %783 = vmatpush1.bf16.msra.mxu0 0
      %784 = vmatprep.subr.bf16.mxu0 0
      %785 = vmatpush1.bf16.msra.mxu0 0
      %786 = vmatprep.subr.bf16.mxu0 0
      %787 = vmatpush1.bf16.msra.mxu0 0
      %788 = vmatprep.subr.bf16.mxu0 0
      %789 = vmatpush1.bf16.msra.mxu0 0
      %790 = vmatprep.subr.bf16.mxu0 0
      %791 = vmatpush1.bf16.msra.mxu0 0
      %792 = vmatprep.subr.bf16.mxu0 0
      %793 = vmatpush1.bf16.msra.mxu0 0
      %794 = vmatprep.mubr.bf16.mxu0 0
      %795 = vmatmul.mubr.bf16.gmra.mrb[0].mxu0 %v760
      %v796 = vpop.f32.mrb[0].mxu0
      %v797 = vadd.f32 %v745, %v796
      %v798 = vpop.f32.mrb[0].mxu0
      %v799 = vpop.f32.mrb[0].mxu0
      %v800 = vpop.f32.mrb[0].mxu0
      %801 = vdwg.mxu0
      %v802 = vmul.f32 %v797, 0.5
      %v803 = vmul.f32 %v797, 0.70710677
      %v804 = verf.f32.pop %v803
      %v805 = vadd.f32 %v804, 1.0
      %v806 = vmul.f32 %v802, %v805
      %v807 = vpack.c.bf16 %v806, %v806
      %v808 = vld [vmem:[%s9] sm:$0xf]
      %v809 = vld [vmem:[%s9 + $0x4] sm:$0xf]
      %v810 = vld [vmem:[%s9 + $0x8] sm:$0xf]
      %v811 = vld [vmem:[%s9 + $0xc] sm:$0xf]
      %v812 = vld [vmem:[%s9 + $0x10] sm:$0xf]
      %v813 = vld [vmem:[%s9 + $0x14] sm:$0xf]
      %v814 = vld [vmem:[%s9 + $0x18] sm:$0xf]
      %v815 = vld [vmem:[%s9 + $0x1c] sm:$0xf]
      %v816 = vld [vmem:[%s10] sm:$0x1]
      %v818 = vlaneseq
      %v819 = vshrl.u32 %v818, 7
      %v820 = vsub.s32 0, %v819
      %v821 = vrot.slane %v816, %v820
      %v831 = vunpack.c.l.b16 %v808
      %v832 = vunpack.c.l.b16 %v809
      %v833 = vunpack.c.l.b16 %v810
      %v834 = vunpack.c.l.b16 %v811
      %v835 = vunpack.c.l.b16 %v812
      %v836 = vunpack.c.l.b16 %v813
      %v837 = vunpack.c.l.b16 %v814
      %v838 = vunpack.c.l.b16 %v815
      %v839 = vpack.c.b16 %v832, %v831
      %v840 = vpack.c.b16 %v834, %v833
      %v841 = vpack.c.b16 %v836, %v835
      %v842 = vpack.c.b16 %v838, %v837
      %vm847 = vcmask 523264
      %v849 = vsel %vm847, %v807, 0
      %851 = vmatprep.subr.bf16.mxu0 0
      %852 = vmatpush1.bf16.msra.mxu0 %v839
      %853 = vmatprep.subr.bf16.mxu0 0
      %854 = vmatpush1.bf16.msra.mxu0 %v840
      %855 = vmatprep.subr.bf16.mxu0 0
      %856 = vmatpush1.bf16.msra.mxu0 %v841
      %857 = vmatprep.subr.bf16.mxu0 0
      %858 = vmatpush1.bf16.msra.mxu0 %v842
      %859 = vmatprep.subr.bf16.mxu0 0
      %860 = vmatpush1.bf16.msra.mxu0 0
      %861 = vmatprep.subr.bf16.mxu0 0
      %862 = vmatpush1.bf16.msra.mxu0 0
      %863 = vmatprep.subr.bf16.mxu0 0
      %864 = vmatpush1.bf16.msra.mxu0 0
      %865 = vmatprep.subr.bf16.mxu0 0
      %866 = vmatpush1.bf16.msra.mxu0 0
      %867 = vmatprep.subr.bf16.mxu0 0
      %868 = vmatpush1.bf16.msra.mxu0 0
      %869 = vmatprep.subr.bf16.mxu0 0
      %870 = vmatpush1.bf16.msra.mxu0 0
      %871 = vmatprep.subr.bf16.mxu0 0
      %872 = vmatpush1.bf16.msra.mxu0 0
      %873 = vmatprep.subr.bf16.mxu0 0
      %874 = vmatpush1.bf16.msra.mxu0 0
      %875 = vmatprep.subr.bf16.mxu0 0
      %876 = vmatpush1.bf16.msra.mxu0 0
      %877 = vmatprep.subr.bf16.mxu0 0
      %878 = vmatpush1.bf16.msra.mxu0 0
      %879 = vmatprep.subr.bf16.mxu0 0
      %880 = vmatpush1.bf16.msra.mxu0 0
      %881 = vmatprep.subr.bf16.mxu0 0
      %882 = vmatpush1.bf16.msra.mxu0 0
      %883 = vmatprep.mubr.bf16.mxu0 0
      %884 = vmatmul.mubr.bf16.gmra.mrb[0].mxu0 %v849
      %v885 = vpop.f32.mrb[0].mxu0
      %v886 = vadd.f32 %v821, %v885
      %v887 = vpop.f32.mrb[0].mxu0
      %v888 = vpop.f32.mrb[0].mxu0
      %v889 = vpop.f32.mrb[0].mxu0
      %890 = vdwg.mxu0
      %v891 = vadd.f32 %v886, %v734
      %v892 = vld [vmem:[%s11] sm:$0x1]
      %v893 = vld [vmem:[%s12] sm:$0x1]
      %v894 = vsel %vm697, %v891, 0.0
      %895 = vadd.xlane.f32.xlu0 %v894
      %v896 = vpop.xlane.xlu0 %895
      %v897 = vmul.f32 %v896, %v701
      %v898 = vsub.f32 %v891, %v897
      %v899 = vmul.f32 %v898, %v898
      %v900 = vsel %vm697, %v899, 0.0
      %901 = vadd.xlane.f32.xlu0 %v900
      %v902 = vpop.xlane.xlu0 %901
      %v903 = vmul.f32 %v902, %v708
      %v904 = vrsqrt.pop %v903
      %v905 = vmul.f32 %v903, %v904
      %vm906 = vcmp.eq.f32.partialorder %v903, inf
      %v907 = vsel %vm906, %v903, %v905
      %vm908 = vcmp.eq.f32.partialorder %v903, 0.0
      %v909 = vand.u32 %v903, 2147483648
      %v910 = vsel %vm908, %v909, %v907
      %v911 = vadd.f32 %v910, 1e-06
      %v912 = vrcp.pop %v911
      %v913 = vmul.f32 1.0, %v912
      %v915 = vlaneseq
      %v916 = vshrl.u32 %v915, 7
      %v917 = vsub.s32 0, %v916
      %v918 = vrot.slane %v892, %v917
      %v920 = vmul.f32 %v918, %v898
      %v921 = vmul.f32 %v920, %v913
      %v923 = vlaneseq
      %v924 = vshrl.u32 %v923, 7
      %v925 = vsub.s32 0, %v924
      %v926 = vrot.slane %v893, %v925
      %v928 = vadd.f32 %v921, %v926
      %929 = vst.msk [vmem:[%s435] sm:$0xff] %vm697, %v928
      %p930 = scmp.lt.s32.totalorder %s24, 1
      %s931 = scalar_select %p930, %s24, 1
      %s932 = smul.addr %s931, 8
      %s933 = scalar_lea.vmem %s13, %s932
      // Predicated region
      $region80: #{_encode.2} parent=71 // pred_check
        %p934 = pneg %p320
      $region81: #{_encode.2} parent=71 // pred_check_branch
        %936 = sbr.rel (%p934) target = $region83
      $region82: #{_encode.2} parent=71 // pred_region
        _
      $region83: #{_encode.2} parent=71 // pred_fallthru
        _
    $region72: #{_encode.2} parent=5 // pred_fallthru
      _
    %p937 = scmp.le.s32.totalorder 2, %s19
    // Predicated region
    $region84: #{_encode.2} parent=5 // pred_check
      %p938 = pneg %p937
    $region85: #{_encode.2} parent=5 // pred_check_branch
      %940 = sbr.rel (%p938) target = $region87
    $region86: #{_encode.2} parent=5 // pred_region
      %s941 = ssub.s32 %s19, 2
      // Predicated region
      $region88: #{_encode.2} parent=86 // pred_check
        %p942 = pneg %p326
      $region89: #{_encode.2} parent=86 // pred_check_branch
        %944 = sbr.rel (%p942) target = $region91
      $region90: #{_encode.2} parent=86 // pred_region
        %p945 = scmp.lt.s32.totalorder %s25, 1
        %s946 = scalar_select %p945, %s25, 1
        %s947 = smul.addr %s946, 8
        %s948 = scalar_lea.vmem %s13, %s947
      $region91: #{_encode.2} parent=86 // pred_fallthru
        _
    $region87: #{_encode.2} parent=5 // pred_fallthru
      _
  $region6: #{_encode.2} parent=0 // loop_footer
    %s23 = sadd.s32 1, %s19
  $region7: #{_encode.2} parent=0 // loop_footer_branch
    %18 = sbr.rel target = $region3
  $region8: #{_encode.2} parent=0 // loop_exit
    _

</llo_original>
